<compile_context>
chip_gen: v5e
topology: v5e:2x2
jax: 0.10.0
libtpu: 0.0.40
codegen_flags: <defaults>
</compile_context>

<pallas_src>
import functools

import jax
import jax.numpy as jnp
from jax.experimental import pallas as pl
from jax.experimental.pallas import tpu as pltpu

_BN_EPS = 1e-5
# Tiny kernel (<1 MiB resident); 32 MiB is safe on v5e/v6e/v7x defaults.
_VMEM_LIMIT = 32 * 1024 * 1024


def _round_up(x, m):
    return (x + m - 1) // m * m


def _apply_act(a, slope):
    if slope == 0.0:
        return jnp.maximum(a, 0.0)            # ReLU
    return jnp.where(a >= 0, a, slope * a)    # LeakyReLU


# ----------------------------------------------------------------------------
# Single fused kernel: conv1 -> BN1 -> act -> conv2 -> BN2 -> act.
# Activations: (C_pad, N*H*W)  (channels on sublanes, batch*spatial on lanes).
# ----------------------------------------------------------------------------
def _encoder_block_kernel(x_ref, w1_ref, w2_ref, g1_ref, b1_ref, g2_ref,
                          b2_ref, mask_ref, o_ref, *, img_w, slope, mxu_bf16):
    # x_ref   : (Cin_p,  L)        input, L = N*H*W
    # w*_ref  : (9, Cout_p, Cin_p) conv taps, t = dy*3 + dx
    # g*/b*   : (Cout_p, 1)        BatchNorm gamma / beta
    # mask_ref: (9, L)             1.0 where a tap's source pixel is in-bounds
    # o_ref   : (Cout_p, L)        block output
    a0 = x_ref[...].astype(jnp.float32)
    mask = mask_ref[...].astype(jnp.float32)

    def conv3x3(a, w_ref):
        # 9 per-tap accumulated matmuls; taps built in-register (no scratch).
        lsize = a.shape[1]
        acc = None
        for dy in range(3):
            for dx in range(3):
                t = dy * 3 + dx
                s = (dy - 1) * img_w + (dx - 1)   # flat lane offset of tap
                tap = a if s == 0 else jnp.roll(a, (-s) % lsize, axis=1)
                if t != 4:                        # center tap always in-bounds
                    tap = tap * mask[t:t + 1, :]
                wt = w_ref[t].astype(jnp.float32)  # (Cout_p, Cin_p)
                if mxu_bf16:
                    wt = wt.astype(jnp.bfloat16)
                    tap = tap.astype(jnp.bfloat16)
                part = jnp.dot(wt, tap, preferred_element_type=jnp.float32)
                acc = part if acc is None else acc + part
        return acc                                 # (Cout_p, L) f32

    def bn_act(y, g_ref, b_ref):
        # Training-mode batch stats (biased variance) over the whole batch,
        # two-pass (mean-centered) for numerical robustness.
        mean = jnp.mean(y, axis=1, keepdims=True)
        cen = y - mean
        var = jnp.mean(cen * cen, axis=1, keepdims=True)
        a = cen * (g_ref[...] * jax.lax.rsqrt(var + _BN_EPS)) + b_ref[...]
        return _apply_act(a, slope)

    a1 = bn_act(conv3x3(a0, w1_ref), g1_ref, b1_ref)
    o_ref[...] = bn_act(conv3x3(a1, w2_ref), g2_ref, b2_ref).astype(o_ref.dtype)


# ----------------------------------------------------------------------------
# Wrapper-side one-time prep (tiny; all before the single pallas_call).
# ----------------------------------------------------------------------------
def _make_tap_masks(h, w):
    yy, xx = jnp.meshgrid(jnp.arange(h), jnp.arange(w), indexing="ij")
    rows = []
    for dy in range(3):
        for dx in range(3):
            valid = ((yy + dy - 1 >= 0) & (yy + dy - 1 < h) &
                     (xx + dx - 1 >= 0) & (xx + dx - 1 < w))
            rows.append(valid.reshape(-1))
    return jnp.stack(rows, axis=0).astype(jnp.float32)          # (9, H*W)


def _prep_conv_weight(w_oihw, cin_p, cout_p):
    # PyTorch (Cout, Cin, 3, 3) -> (9, Cout_p, Cin_p), t = dy*3 + dx.
    cout, cin, kh, kw = w_oihw.shape
    taps = jnp.transpose(w_oihw.astype(jnp.float32), (2, 3, 0, 1))
    taps = taps.reshape(kh * kw, cout, cin)
    return jnp.pad(taps, ((0, 0), (0, cout_p - cout), (0, cin_p - cin)))


def _pad_vec(v, c_p, fill):
    c = v.shape[0]
    v = v.astype(jnp.float32)
    if c_p == c:
        return v
    return jnp.concatenate([v, jnp.full((c_p - c,), fill, jnp.float32)], axis=0)


# ----------------------------------------------------------------------------
# EncoderBlock forward (NCHW in / NCHW out, like the PyTorch module).
# ----------------------------------------------------------------------------
def init_encoder_block_params(key, in_channels, out_channels):
    k1, k2 = jax.random.split(key)
    # deterministic synthetic init (conv ~ N(0, 0.1^2); BN: gamma=1, beta=0)
    w1 = 0.1 * jax.random.normal(k1, (out_channels, in_channels, 3, 3), jnp.float32)
    w2 = 0.1 * jax.random.normal(k2, (out_channels, out_channels, 3, 3), jnp.float32)
    return {
        "w1": w1,
        "gamma1": jnp.ones((out_channels,), jnp.float32),
        "beta1": jnp.zeros((out_channels,), jnp.float32),
        "w2": w2,
        "gamma2": jnp.ones((out_channels,), jnp.float32),
        "beta2": jnp.zeros((out_channels,), jnp.float32),
    }


def encoder_block(x_nchw, params, activation="relu", mxu_bf16=False):
    if activation == "relu":
        slope = 0.0
    elif activation == "leaky_relu":
        slope = 0.01                       # PyTorch default negative_slope
    else:
        raise ValueError(f"Unsupported activation function: {activation}")

    n, cin, h, w = x_nchw.shape
    hw = h * w
    lanes = n * hw                         # batch folded onto the lane axis
    cout = params["w1"].shape[0]
    cin_p = _round_up(cin, 8)              # channels live on sublanes
    cout_p = _round_up(cout, 8)

    # Layout prep: NCHW -> (Cin_p, N*H*W).  One-time ~16 KB transpose/pad.
    x = jnp.transpose(x_nchw, (1, 0, 2, 3)).reshape(cin, lanes)
    x = jnp.pad(x.astype(jnp.float32), ((0, cin_p - cin), (0, 0)))

    masks = jnp.tile(_make_tap_masks(h, w), (1, n))             # (9, N*HW)
    w1 = _prep_conv_weight(params["w1"], cin_p, cout_p)
    w2 = _prep_conv_weight(params["w2"], cout_p, cout_p)
    g1 = _pad_vec(params["gamma1"], cout_p, 1.0)[:, None]
    b1 = _pad_vec(params["beta1"], cout_p, 0.0)[:, None]
    g2 = _pad_vec(params["gamma2"], cout_p, 1.0)[:, None]
    b2 = _pad_vec(params["beta2"], cout_p, 0.0)[:, None]

    kern = functools.partial(_encoder_block_kernel, img_w=w, slope=slope,
                             mxu_bf16=mxu_bf16)
    out = pl.pallas_call(
        kern,
        out_shape=jax.ShapeDtypeStruct((cout_p, lanes), jnp.float32),
        grid=(1,),                          # whole block in one grid step
        in_specs=[
            pl.BlockSpec((cin_p, lanes), lambda i: (0, 0)),
            pl.BlockSpec((9, cout_p, cin_p), lambda i: (0, 0, 0)),
            pl.BlockSpec((9, cout_p, cout_p), lambda i: (0, 0, 0)),
            pl.BlockSpec((cout_p, 1), lambda i: (0, 0)),
            pl.BlockSpec((cout_p, 1), lambda i: (0, 0)),
            pl.BlockSpec((cout_p, 1), lambda i: (0, 0)),
            pl.BlockSpec((cout_p, 1), lambda i: (0, 0)),
            pl.BlockSpec((9, lanes), lambda i: (0, 0)),
        ],
        out_specs=pl.BlockSpec((cout_p, lanes), lambda i: (0, 0)),
        compiler_params=pltpu.CompilerParams(
            dimension_semantics=("arbitrary",),
            vmem_limit_bytes=_VMEM_LIMIT,
        ),
    )(x, w1, w2, g1, b1, g2, b2, masks)

    out = out[:cout].reshape(cout, n, h, w)
    return jnp.transpose(out, (1, 0, 2, 3))


# ----------------------------------------------------------------------------
# Pure-JAX reference (training-mode BatchNorm forward) for verification.
# ----------------------------------------------------------------------------
def _reference_encoder_block(x, params, activation):
    slope = 0.0 if activation == "relu" else 0.01

    def act(a):
        return jnp.maximum(a, 0.0) if slope == 0.0 else jnp.where(a >= 0, a, slope * a)

    def conv(a, w):
        return jax.lax.conv_general_dilated(
            a, w, window_strides=(1, 1), padding="SAME",
            dimension_numbers=("NCHW", "OIHW", "NCHW"),
            precision=jax.lax.Precision.HIGHEST)

    def bn(a, g, b):
        mean = jnp.mean(a, axis=(0, 2, 3), keepdims=True)
        var = jnp.mean((a - mean) ** 2, axis=(0, 2, 3), keepdims=True)
        return ((a - mean) * jax.lax.rsqrt(var + _BN_EPS)
                * g[None, :, None, None] + b[None, :, None, None])

    y = act(bn(conv(x, params["w1"]), params["gamma1"], params["beta1"]))
    y = act(bn(conv(y, params["w2"]), params["gamma2"], params["beta2"]))
    return y


if __name__ == "__main__":
    key = jax.random.PRNGKey(0)
    kx, kp = jax.random.split(key)

    N, Cin, Cout, H, W = 2, 4, 8, 16, 16
    x = jax.random.normal(kx, (N, Cin, H, W), jnp.float32)   # NCHW like PyTorch
    params = init_encoder_block_params(kp, Cin, Cout)

    fwd = jax.jit(encoder_block, static_argnames=("activation", "mxu_bf16"))
    y = jax.block_until_ready(fwd(x, params, activation="relu"))

    assert y.shape == (N, Cout, H, W), y.shape
    assert bool(jnp.all(jnp.isfinite(y))), "non-finite output"

    y_ref = _reference_encoder_block(x, params, "relu")
    max_err = float(jnp.max(jnp.abs(y - y_ref)))
    assert max_err < 5e-3, f"max abs error vs reference: {max_err}"

    print("KERNEL_OK")
</pallas_src>

<mosaic_0001>
module attributes {stable_mosaic.version = 11 : i64} {
  func.func @_encoder_block_kernel(%arg0: i32, %arg1: memref<8x512xf32, #tpu.memory_space<vmem>>, %arg2: memref<9x8x8xf32, #tpu.memory_space<vmem>>, %arg3: memref<9x8x8xf32, #tpu.memory_space<vmem>>, %arg4: memref<8x1xf32, #tpu.memory_space<vmem>>, %arg5: memref<8x1xf32, #tpu.memory_space<vmem>>, %arg6: memref<8x1xf32, #tpu.memory_space<vmem>>, %arg7: memref<8x1xf32, #tpu.memory_space<vmem>>, %arg8: memref<9x512xf32, #tpu.memory_space<vmem>>, %arg9: memref<8x512xf32, #tpu.memory_space<vmem>>) attributes {dimension_semantics = [#tpu.dimension_semantics<arbitrary>], iteration_bounds = array<i64: 1>, scalar_prefetch = 0 : i64, scratch_operands = 0 : i64, tpu.core_type = #tpu.core_type<tc>, window_params = [{pipeline_mode = #tpu.pipeline_mode<synchronous>, transform_indices = @transform_0, window_bounds = array<i64: 8, 512>}, {pipeline_mode = #tpu.pipeline_mode<synchronous>, transform_indices = @transform_1, window_bounds = array<i64: 9, 8, 8>}, {pipeline_mode = #tpu.pipeline_mode<synchronous>, transform_indices = @transform_2, window_bounds = array<i64: 9, 8, 8>}, {pipeline_mode = #tpu.pipeline_mode<synchronous>, transform_indices = @transform_3, window_bounds = array<i64: 8, 1>}, {pipeline_mode = #tpu.pipeline_mode<synchronous>, transform_indices = @transform_4, window_bounds = array<i64: 8, 1>}, {pipeline_mode = #tpu.pipeline_mode<synchronous>, transform_indices = @transform_5, window_bounds = array<i64: 8, 1>}, {pipeline_mode = #tpu.pipeline_mode<synchronous>, transform_indices = @transform_6, window_bounds = array<i64: 8, 1>}, {pipeline_mode = #tpu.pipeline_mode<synchronous>, transform_indices = @transform_7, window_bounds = array<i64: 9, 512>}, {pipeline_mode = #tpu.pipeline_mode<synchronous>, transform_indices = @transform_8, window_bounds = array<i64: 8, 512>}]} {
    %c0 = arith.constant 0 : index
    %c0_0 = arith.constant 0 : index
    %0 = vector.load %arg1[%c0, %c0_0] : memref<8x512xf32, #tpu.memory_space<vmem>>, vector<8x512xf32>
    %c0_1 = arith.constant 0 : index
    %c0_2 = arith.constant 0 : index
    %1 = vector.load %arg8[%c0_1, %c0_2] : memref<9x512xf32, #tpu.memory_space<vmem>>, vector<9x512xf32>
    %2 = vector.extract_strided_slice %0 {offsets = [0, 495], sizes = [8, 17], strides = [1, 1]} : vector<8x512xf32> to vector<8x17xf32>
    %3 = vector.extract_strided_slice %0 {offsets = [0, 0], sizes = [8, 495], strides = [1, 1]} : vector<8x512xf32> to vector<8x495xf32>
    %4 = tpu.concatenate %2, %3 in 1 : vector<8x17xf32>, vector<8x495xf32> -> vector<8x512xf32>
    %5 = vector.extract_strided_slice %1 {offsets = [0, 0], sizes = [1, 512], strides = [1, 1]} : vector<9x512xf32> to vector<1x512xf32>
    %6 = vector.broadcast %5 : vector<1x512xf32> to vector<8x512xf32>
    %7 = arith.mulf %4, %6 : vector<8x512xf32>
    %c0_3 = arith.constant 0 : index
    %c0_4 = arith.constant 0 : index
    %c0_5 = arith.constant 0 : index
    %8 = vector.load %arg2[%c0_3, %c0_4, %c0_5] : memref<9x8x8xf32, #tpu.memory_space<vmem>>, vector<1x8x8xf32>
    %9 = vector.shape_cast %8 : vector<1x8x8xf32> to vector<8x8xf32>
    %cst = arith.constant dense<0.000000e+00> : vector<8x512xf32>
    %10 = tpu.matmul %9, %7, %cst {dimension_numbers = #tpu.dot_dimension_numbers<[1], [0], [0], [1], [0, 0, 1, 1], [], []>} : vector<8x8xf32>, vector<8x512xf32>, vector<8x512xf32> -> vector<8x512xf32>
    %11 = vector.extract_strided_slice %0 {offsets = [0, 496], sizes = [8, 16], strides = [1, 1]} : vector<8x512xf32> to vector<8x16xf32>
    %12 = vector.extract_strided_slice %0 {offsets = [0, 0], sizes = [8, 496], strides = [1, 1]} : vector<8x512xf32> to vector<8x496xf32>
    %13 = tpu.concatenate %11, %12 in 1 : vector<8x16xf32>, vector<8x496xf32> -> vector<8x512xf32>
    %14 = vector.extract_strided_slice %1 {offsets = [1, 0], sizes = [1, 512], strides = [1, 1]} : vector<9x512xf32> to vector<1x512xf32>
    %15 = vector.broadcast %14 : vector<1x512xf32> to vector<8x512xf32>
    %16 = arith.mulf %13, %15 : vector<8x512xf32>
    %c1 = arith.constant 1 : index
    %c0_6 = arith.constant 0 : index
    %c0_7 = arith.constant 0 : index
    %17 = vector.load %arg2[%c1, %c0_6, %c0_7] : memref<9x8x8xf32, #tpu.memory_space<vmem>>, vector<1x8x8xf32>
    %18 = vector.shape_cast %17 : vector<1x8x8xf32> to vector<8x8xf32>
    %cst_8 = arith.constant dense<0.000000e+00> : vector<8x512xf32>
    %19 = tpu.matmul %18, %16, %cst_8 {dimension_numbers = #tpu.dot_dimension_numbers<[1], [0], [0], [1], [0, 0, 1, 1], [], []>} : vector<8x8xf32>, vector<8x512xf32>, vector<8x512xf32> -> vector<8x512xf32>
    %20 = arith.addf %10, %19 : vector<8x512xf32>
    %21 = vector.extract_strided_slice %0 {offsets = [0, 497], sizes = [8, 15], strides = [1, 1]} : vector<8x512xf32> to vector<8x15xf32>
    %22 = vector.extract_strided_slice %0 {offsets = [0, 0], sizes = [8, 497], strides = [1, 1]} : vector<8x512xf32> to vector<8x497xf32>
    %23 = tpu.concatenate %21, %22 in 1 : vector<8x15xf32>, vector<8x497xf32> -> vector<8x512xf32>
    %24 = vector.extract_strided_slice %1 {offsets = [2, 0], sizes = [1, 512], strides = [1, 1]} : vector<9x512xf32> to vector<1x512xf32>
    %25 = vector.broadcast %24 : vector<1x512xf32> to vector<8x512xf32>
    %26 = arith.mulf %23, %25 : vector<8x512xf32>
    %c2 = arith.constant 2 : index
    %c0_9 = arith.constant 0 : index
    %c0_10 = arith.constant 0 : index
    %27 = vector.load %arg2[%c2, %c0_9, %c0_10] : memref<9x8x8xf32, #tpu.memory_space<vmem>>, vector<1x8x8xf32>
    %28 = vector.shape_cast %27 : vector<1x8x8xf32> to vector<8x8xf32>
    %cst_11 = arith.constant dense<0.000000e+00> : vector<8x512xf32>
    %29 = tpu.matmul %28, %26, %cst_11 {dimension_numbers = #tpu.dot_dimension_numbers<[1], [0], [0], [1], [0, 0, 1, 1], [], []>} : vector<8x8xf32>, vector<8x512xf32>, vector<8x512xf32> -> vector<8x512xf32>
    %30 = arith.addf %20, %29 : vector<8x512xf32>
    %31 = vector.extract_strided_slice %0 {offsets = [0, 511], sizes = [8, 1], strides = [1, 1]} : vector<8x512xf32> to vector<8x1xf32>
    %32 = vector.extract_strided_slice %0 {offsets = [0, 0], sizes = [8, 511], strides = [1, 1]} : vector<8x512xf32> to vector<8x511xf32>
    %33 = tpu.concatenate %31, %32 in 1 : vector<8x1xf32>, vector<8x511xf32> -> vector<8x512xf32>
    %34 = vector.extract_strided_slice %1 {offsets = [3, 0], sizes = [1, 512], strides = [1, 1]} : vector<9x512xf32> to vector<1x512xf32>
    %35 = vector.broadcast %34 : vector<1x512xf32> to vector<8x512xf32>
    %36 = arith.mulf %33, %35 : vector<8x512xf32>
    %c3 = arith.constant 3 : index
    %c0_12 = arith.constant 0 : index
    %c0_13 = arith.constant 0 : index
    %37 = vector.load %arg2[%c3, %c0_12, %c0_13] : memref<9x8x8xf32, #tpu.memory_space<vmem>>, vector<1x8x8xf32>
    %38 = vector.shape_cast %37 : vector<1x8x8xf32> to vector<8x8xf32>
    %cst_14 = arith.constant dense<0.000000e+00> : vector<8x512xf32>
    %39 = tpu.matmul %38, %36, %cst_14 {dimension_numbers = #tpu.dot_dimension_numbers<[1], [0], [0], [1], [0, 0, 1, 1], [], []>} : vector<8x8xf32>, vector<8x512xf32>, vector<8x512xf32> -> vector<8x512xf32>
    %40 = arith.addf %30, %39 : vector<8x512xf32>
    %c4 = arith.constant 4 : index
    %c0_15 = arith.constant 0 : index
    %c0_16 = arith.constant 0 : index
    %41 = vector.load %arg2[%c4, %c0_15, %c0_16] : memref<9x8x8xf32, #tpu.memory_space<vmem>>, vector<1x8x8xf32>
    %42 = vector.shape_cast %41 : vector<1x8x8xf32> to vector<8x8xf32>
    %cst_17 = arith.constant dense<0.000000e+00> : vector<8x512xf32>
    %43 = tpu.matmul %42, %0, %cst_17 {dimension_numbers = #tpu.dot_dimension_numbers<[1], [0], [0], [1], [0, 0, 1, 1], [], []>} : vector<8x8xf32>, vector<8x512xf32>, vector<8x512xf32> -> vector<8x512xf32>
    %44 = arith.addf %40, %43 : vector<8x512xf32>
    %45 = vector.extract_strided_slice %0 {offsets = [0, 1], sizes = [8, 511], strides = [1, 1]} : vector<8x512xf32> to vector<8x511xf32>
    %46 = vector.extract_strided_slice %0 {offsets = [0, 0], sizes = [8, 1], strides = [1, 1]} : vector<8x512xf32> to vector<8x1xf32>
    %47 = tpu.concatenate %45, %46 in 1 : vector<8x511xf32>, vector<8x1xf32> -> vector<8x512xf32>
    %48 = vector.extract_strided_slice %1 {offsets = [5, 0], sizes = [1, 512], strides = [1, 1]} : vector<9x512xf32> to vector<1x512xf32>
    %49 = vector.broadcast %48 : vector<1x512xf32> to vector<8x512xf32>
    %50 = arith.mulf %47, %49 : vector<8x512xf32>
    %c5 = arith.constant 5 : index
    %c0_18 = arith.constant 0 : index
    %c0_19 = arith.constant 0 : index
    %51 = vector.load %arg2[%c5, %c0_18, %c0_19] : memref<9x8x8xf32, #tpu.memory_space<vmem>>, vector<1x8x8xf32>
    %52 = vector.shape_cast %51 : vector<1x8x8xf32> to vector<8x8xf32>
    %cst_20 = arith.constant dense<0.000000e+00> : vector<8x512xf32>
    %53 = tpu.matmul %52, %50, %cst_20 {dimension_numbers = #tpu.dot_dimension_numbers<[1], [0], [0], [1], [0, 0, 1, 1], [], []>} : vector<8x8xf32>, vector<8x512xf32>, vector<8x512xf32> -> vector<8x512xf32>
    %54 = arith.addf %44, %53 : vector<8x512xf32>
    %55 = vector.extract_strided_slice %0 {offsets = [0, 15], sizes = [8, 497], strides = [1, 1]} : vector<8x512xf32> to vector<8x497xf32>
    %56 = vector.extract_strided_slice %0 {offsets = [0, 0], sizes = [8, 15], strides = [1, 1]} : vector<8x512xf32> to vector<8x15xf32>
    %57 = tpu.concatenate %55, %56 in 1 : vector<8x497xf32>, vector<8x15xf32> -> vector<8x512xf32>
    %58 = vector.extract_strided_slice %1 {offsets = [6, 0], sizes = [1, 512], strides = [1, 1]} : vector<9x512xf32> to vector<1x512xf32>
    %59 = vector.broadcast %58 : vector<1x512xf32> to vector<8x512xf32>
    %60 = arith.mulf %57, %59 : vector<8x512xf32>
    %c6 = arith.constant 6 : index
    %c0_21 = arith.constant 0 : index
    %c0_22 = arith.constant 0 : index
    %61 = vector.load %arg2[%c6, %c0_21, %c0_22] : memref<9x8x8xf32, #tpu.memory_space<vmem>>, vector<1x8x8xf32>
    %62 = vector.shape_cast %61 : vector<1x8x8xf32> to vector<8x8xf32>
    %cst_23 = arith.constant dense<0.000000e+00> : vector<8x512xf32>
    %63 = tpu.matmul %62, %60, %cst_23 {dimension_numbers = #tpu.dot_dimension_numbers<[1], [0], [0], [1], [0, 0, 1, 1], [], []>} : vector<8x8xf32>, vector<8x512xf32>, vector<8x512xf32> -> vector<8x512xf32>
    %64 = arith.addf %54, %63 : vector<8x512xf32>
    %65 = vector.extract_strided_slice %0 {offsets = [0, 16], sizes = [8, 496], strides = [1, 1]} : vector<8x512xf32> to vector<8x496xf32>
    %66 = vector.extract_strided_slice %0 {offsets = [0, 0], sizes = [8, 16], strides = [1, 1]} : vector<8x512xf32> to vector<8x16xf32>
    %67 = tpu.concatenate %65, %66 in 1 : vector<8x496xf32>, vector<8x16xf32> -> vector<8x512xf32>
    %68 = vector.extract_strided_slice %1 {offsets = [7, 0], sizes = [1, 512], strides = [1, 1]} : vector<9x512xf32> to vector<1x512xf32>
    %69 = vector.broadcast %68 : vector<1x512xf32> to vector<8x512xf32>
    %70 = arith.mulf %67, %69 : vector<8x512xf32>
    %c7 = arith.constant 7 : index
    %c0_24 = arith.constant 0 : index
    %c0_25 = arith.constant 0 : index
    %71 = vector.load %arg2[%c7, %c0_24, %c0_25] : memref<9x8x8xf32, #tpu.memory_space<vmem>>, vector<1x8x8xf32>
    %72 = vector.shape_cast %71 : vector<1x8x8xf32> to vector<8x8xf32>
    %cst_26 = arith.constant dense<0.000000e+00> : vector<8x512xf32>
    %73 = tpu.matmul %72, %70, %cst_26 {dimension_numbers = #tpu.dot_dimension_numbers<[1], [0], [0], [1], [0, 0, 1, 1], [], []>} : vector<8x8xf32>, vector<8x512xf32>, vector<8x512xf32> -> vector<8x512xf32>
    %74 = arith.addf %64, %73 : vector<8x512xf32>
    %75 = vector.extract_strided_slice %0 {offsets = [0, 17], sizes = [8, 495], strides = [1, 1]} : vector<8x512xf32> to vector<8x495xf32>
    %76 = vector.extract_strided_slice %0 {offsets = [0, 0], sizes = [8, 17], strides = [1, 1]} : vector<8x512xf32> to vector<8x17xf32>
    %77 = tpu.concatenate %75, %76 in 1 : vector<8x495xf32>, vector<8x17xf32> -> vector<8x512xf32>
    %78 = vector.extract_strided_slice %1 {offsets = [8, 0], sizes = [1, 512], strides = [1, 1]} : vector<9x512xf32> to vector<1x512xf32>
    %79 = vector.broadcast %78 : vector<1x512xf32> to vector<8x512xf32>
    %80 = arith.mulf %77, %79 : vector<8x512xf32>
    %c8 = arith.constant 8 : index
    %c0_27 = arith.constant 0 : index
    %c0_28 = arith.constant 0 : index
    %81 = vector.load %arg2[%c8, %c0_27, %c0_28] : memref<9x8x8xf32, #tpu.memory_space<vmem>>, vector<1x8x8xf32>
    %82 = vector.shape_cast %81 : vector<1x8x8xf32> to vector<8x8xf32>
    %cst_29 = arith.constant dense<0.000000e+00> : vector<8x512xf32>
    %83 = tpu.matmul %82, %80, %cst_29 {dimension_numbers = #tpu.dot_dimension_numbers<[1], [0], [0], [1], [0, 0, 1, 1], [], []>} : vector<8x8xf32>, vector<8x512xf32>, vector<8x512xf32> -> vector<8x512xf32>
    %84 = arith.addf %74, %83 : vector<8x512xf32>
    %cst_30 = arith.constant dense<0.000000e+00> : vector<8xf32>
    %85 = vector.multi_reduction <add>, %84, %cst_30 [1] : vector<8x512xf32> to vector<8xf32>
    %86 = vector.shape_cast %85 : vector<8xf32> to vector<8x1xf32>
    %cst_31 = arith.constant 5.120000e+02 : f32
    %87 = vector.broadcast %cst_31 : f32 to vector<8x1xf32>
    %88 = arith.divf %86, %87 : vector<8x1xf32>
    %89 = vector.broadcast %88 : vector<8x1xf32> to vector<8x512xf32>
    %90 = arith.subf %84, %89 : vector<8x512xf32>
    %91 = arith.mulf %90, %90 : vector<8x512xf32>
    %cst_32 = arith.constant dense<0.000000e+00> : vector<8xf32>
    %92 = vector.multi_reduction <add>, %91, %cst_32 [1] : vector<8x512xf32> to vector<8xf32>
    %93 = vector.shape_cast %92 : vector<8xf32> to vector<8x1xf32>
    %cst_33 = arith.constant 5.120000e+02 : f32
    %94 = vector.broadcast %cst_33 : f32 to vector<8x1xf32>
    %95 = arith.divf %93, %94 : vector<8x1xf32>
    %c0_34 = arith.constant 0 : index
    %c0_35 = arith.constant 0 : index
    %96 = vector.load %arg4[%c0_34, %c0_35] : memref<8x1xf32, #tpu.memory_space<vmem>>, vector<8x1xf32>
    %cst_36 = arith.constant 9.99999974E-6 : f32
    %97 = vector.broadcast %cst_36 : f32 to vector<8x1xf32>
    %98 = arith.addf %95, %97 : vector<8x1xf32>
    %99 = math.rsqrt %98 : vector<8x1xf32>
    %100 = arith.mulf %96, %99 : vector<8x1xf32>
    %101 = vector.broadcast %100 : vector<8x1xf32> to vector<8x512xf32>
    %102 = arith.mulf %90, %101 : vector<8x512xf32>
    %c0_37 = arith.constant 0 : index
    %c0_38 = arith.constant 0 : index
    %103 = vector.load %arg5[%c0_37, %c0_38] : memref<8x1xf32, #tpu.memory_space<vmem>>, vector<8x1xf32>
    %104 = vector.broadcast %103 : vector<8x1xf32> to vector<8x512xf32>
    %105 = arith.addf %102, %104 : vector<8x512xf32>
    %cst_39 = arith.constant 0.000000e+00 : f32
    %106 = vector.broadcast %cst_39 : f32 to vector<8x512xf32>
    %107 = arith.maximumf %105, %106 : vector<8x512xf32>
    %108 = vector.extract_strided_slice %107 {offsets = [0, 495], sizes = [8, 17], strides = [1, 1]} : vector<8x512xf32> to vector<8x17xf32>
    %109 = vector.extract_strided_slice %107 {offsets = [0, 0], sizes = [8, 495], strides = [1, 1]} : vector<8x512xf32> to vector<8x495xf32>
    %110 = tpu.concatenate %108, %109 in 1 : vector<8x17xf32>, vector<8x495xf32> -> vector<8x512xf32>
    %111 = vector.extract_strided_slice %1 {offsets = [0, 0], sizes = [1, 512], strides = [1, 1]} : vector<9x512xf32> to vector<1x512xf32>
    %112 = vector.broadcast %111 : vector<1x512xf32> to vector<8x512xf32>
    %113 = arith.mulf %110, %112 : vector<8x512xf32>
    %c0_40 = arith.constant 0 : index
    %c0_41 = arith.constant 0 : index
    %c0_42 = arith.constant 0 : index
    %114 = vector.load %arg3[%c0_40, %c0_41, %c0_42] : memref<9x8x8xf32, #tpu.memory_space<vmem>>, vector<1x8x8xf32>
    %115 = vector.shape_cast %114 : vector<1x8x8xf32> to vector<8x8xf32>
    %cst_43 = arith.constant dense<0.000000e+00> : vector<8x512xf32>
    %116 = tpu.matmul %115, %113, %cst_43 {dimension_numbers = #tpu.dot_dimension_numbers<[1], [0], [0], [1], [0, 0, 1, 1], [], []>} : vector<8x8xf32>, vector<8x512xf32>, vector<8x512xf32> -> vector<8x512xf32>
    %117 = vector.extract_strided_slice %107 {offsets = [0, 496], sizes = [8, 16], strides = [1, 1]} : vector<8x512xf32> to vector<8x16xf32>
    %118 = vector.extract_strided_slice %107 {offsets = [0, 0], sizes = [8, 496], strides = [1, 1]} : vector<8x512xf32> to vector<8x496xf32>
    %119 = tpu.concatenate %117, %118 in 1 : vector<8x16xf32>, vector<8x496xf32> -> vector<8x512xf32>
    %120 = vector.extract_strided_slice %1 {offsets = [1, 0], sizes = [1, 512], strides = [1, 1]} : vector<9x512xf32> to vector<1x512xf32>
    %121 = vector.broadcast %120 : vector<1x512xf32> to vector<8x512xf32>
    %122 = arith.mulf %119, %121 : vector<8x512xf32>
    %c1_44 = arith.constant 1 : index
    %c0_45 = arith.constant 0 : index
    %c0_46 = arith.constant 0 : index
    %123 = vector.load %arg3[%c1_44, %c0_45, %c0_46] : memref<9x8x8xf32, #tpu.memory_space<vmem>>, vector<1x8x8xf32>
    %124 = vector.shape_cast %123 : vector<1x8x8xf32> to vector<8x8xf32>
    %cst_47 = arith.constant dense<0.000000e+00> : vector<8x512xf32>
    %125 = tpu.matmul %124, %122, %cst_47 {dimension_numbers = #tpu.dot_dimension_numbers<[1], [0], [0], [1], [0, 0, 1, 1], [], []>} : vector<8x8xf32>, vector<8x512xf32>, vector<8x512xf32> -> vector<8x512xf32>
    %126 = arith.addf %116, %125 : vector<8x512xf32>
    %127 = vector.extract_strided_slice %107 {offsets = [0, 497], sizes = [8, 15], strides = [1, 1]} : vector<8x512xf32> to vector<8x15xf32>
    %128 = vector.extract_strided_slice %107 {offsets = [0, 0], sizes = [8, 497], strides = [1, 1]} : vector<8x512xf32> to vector<8x497xf32>
    %129 = tpu.concatenate %127, %128 in 1 : vector<8x15xf32>, vector<8x497xf32> -> vector<8x512xf32>
    %130 = vector.extract_strided_slice %1 {offsets = [2, 0], sizes = [1, 512], strides = [1, 1]} : vector<9x512xf32> to vector<1x512xf32>
    %131 = vector.broadcast %130 : vector<1x512xf32> to vector<8x512xf32>
    %132 = arith.mulf %129, %131 : vector<8x512xf32>
    %c2_48 = arith.constant 2 : index
    %c0_49 = arith.constant 0 : index
    %c0_50 = arith.constant 0 : index
    %133 = vector.load %arg3[%c2_48, %c0_49, %c0_50] : memref<9x8x8xf32, #tpu.memory_space<vmem>>, vector<1x8x8xf32>
    %134 = vector.shape_cast %133 : vector<1x8x8xf32> to vector<8x8xf32>
    %cst_51 = arith.constant dense<0.000000e+00> : vector<8x512xf32>
    %135 = tpu.matmul %134, %132, %cst_51 {dimension_numbers = #tpu.dot_dimension_numbers<[1], [0], [0], [1], [0, 0, 1, 1], [], []>} : vector<8x8xf32>, vector<8x512xf32>, vector<8x512xf32> -> vector<8x512xf32>
    %136 = arith.addf %126, %135 : vector<8x512xf32>
    %137 = vector.extract_strided_slice %107 {offsets = [0, 511], sizes = [8, 1], strides = [1, 1]} : vector<8x512xf32> to vector<8x1xf32>
    %138 = vector.extract_strided_slice %107 {offsets = [0, 0], sizes = [8, 511], strides = [1, 1]} : vector<8x512xf32> to vector<8x511xf32>
    %139 = tpu.concatenate %137, %138 in 1 : vector<8x1xf32>, vector<8x511xf32> -> vector<8x512xf32>
    %140 = vector.extract_strided_slice %1 {offsets = [3, 0], sizes = [1, 512], strides = [1, 1]} : vector<9x512xf32> to vector<1x512xf32>
    %141 = vector.broadcast %140 : vector<1x512xf32> to vector<8x512xf32>
    %142 = arith.mulf %139, %141 : vector<8x512xf32>
    %c3_52 = arith.constant 3 : index
    %c0_53 = arith.constant 0 : index
    %c0_54 = arith.constant 0 : index
    %143 = vector.load %arg3[%c3_52, %c0_53, %c0_54] : memref<9x8x8xf32, #tpu.memory_space<vmem>>, vector<1x8x8xf32>
    %144 = vector.shape_cast %143 : vector<1x8x8xf32> to vector<8x8xf32>
    %cst_55 = arith.constant dense<0.000000e+00> : vector<8x512xf32>
    %145 = tpu.matmul %144, %142, %cst_55 {dimension_numbers = #tpu.dot_dimension_numbers<[1], [0], [0], [1], [0, 0, 1, 1], [], []>} : vector<8x8xf32>, vector<8x512xf32>, vector<8x512xf32> -> vector<8x512xf32>
    %146 = arith.addf %136, %145 : vector<8x512xf32>
    %c4_56 = arith.constant 4 : index
    %c0_57 = arith.constant 0 : index
    %c0_58 = arith.constant 0 : index
    %147 = vector.load %arg3[%c4_56, %c0_57, %c0_58] : memref<9x8x8xf32, #tpu.memory_space<vmem>>, vector<1x8x8xf32>
    %148 = vector.shape_cast %147 : vector<1x8x8xf32> to vector<8x8xf32>
    %cst_59 = arith.constant dense<0.000000e+00> : vector<8x512xf32>
    %149 = tpu.matmul %148, %107, %cst_59 {dimension_numbers = #tpu.dot_dimension_numbers<[1], [0], [0], [1], [0, 0, 1, 1], [], []>} : vector<8x8xf32>, vector<8x512xf32>, vector<8x512xf32> -> vector<8x512xf32>
    %150 = arith.addf %146, %149 : vector<8x512xf32>
    %151 = vector.extract_strided_slice %107 {offsets = [0, 1], sizes = [8, 511], strides = [1, 1]} : vector<8x512xf32> to vector<8x511xf32>
    %152 = vector.extract_strided_slice %107 {offsets = [0, 0], sizes = [8, 1], strides = [1, 1]} : vector<8x512xf32> to vector<8x1xf32>
    %153 = tpu.concatenate %151, %152 in 1 : vector<8x511xf32>, vector<8x1xf32> -> vector<8x512xf32>
    %154 = vector.extract_strided_slice %1 {offsets = [5, 0], sizes = [1, 512], strides = [1, 1]} : vector<9x512xf32> to vector<1x512xf32>
    %155 = vector.broadcast %154 : vector<1x512xf32> to vector<8x512xf32>
    %156 = arith.mulf %153, %155 : vector<8x512xf32>
    %c5_60 = arith.constant 5 : index
    %c0_61 = arith.constant 0 : index
    %c0_62 = arith.constant 0 : index
    %157 = vector.load %arg3[%c5_60, %c0_61, %c0_62] : memref<9x8x8xf32, #tpu.memory_space<vmem>>, vector<1x8x8xf32>
    %158 = vector.shape_cast %157 : vector<1x8x8xf32> to vector<8x8xf32>
    %cst_63 = arith.constant dense<0.000000e+00> : vector<8x512xf32>
    %159 = tpu.matmul %158, %156, %cst_63 {dimension_numbers = #tpu.dot_dimension_numbers<[1], [0], [0], [1], [0, 0, 1, 1], [], []>} : vector<8x8xf32>, vector<8x512xf32>, vector<8x512xf32> -> vector<8x512xf32>
    %160 = arith.addf %150, %159 : vector<8x512xf32>
    %161 = vector.extract_strided_slice %107 {offsets = [0, 15], sizes = [8, 497], strides = [1, 1]} : vector<8x512xf32> to vector<8x497xf32>
    %162 = vector.extract_strided_slice %107 {offsets = [0, 0], sizes = [8, 15], strides = [1, 1]} : vector<8x512xf32> to vector<8x15xf32>
    %163 = tpu.concatenate %161, %162 in 1 : vector<8x497xf32>, vector<8x15xf32> -> vector<8x512xf32>
    %164 = vector.extract_strided_slice %1 {offsets = [6, 0], sizes = [1, 512], strides = [1, 1]} : vector<9x512xf32> to vector<1x512xf32>
    %165 = vector.broadcast %164 : vector<1x512xf32> to vector<8x512xf32>
    %166 = arith.mulf %163, %165 : vector<8x512xf32>
    %c6_64 = arith.constant 6 : index
    %c0_65 = arith.constant 0 : index
    %c0_66 = arith.constant 0 : index
    %167 = vector.load %arg3[%c6_64, %c0_65, %c0_66] : memref<9x8x8xf32, #tpu.memory_space<vmem>>, vector<1x8x8xf32>
    %168 = vector.shape_cast %167 : vector<1x8x8xf32> to vector<8x8xf32>
    %cst_67 = arith.constant dense<0.000000e+00> : vector<8x512xf32>
    %169 = tpu.matmul %168, %166, %cst_67 {dimension_numbers = #tpu.dot_dimension_numbers<[1], [0], [0], [1], [0, 0, 1, 1], [], []>} : vector<8x8xf32>, vector<8x512xf32>, vector<8x512xf32> -> vector<8x512xf32>
    %170 = arith.addf %160, %169 : vector<8x512xf32>
    %171 = vector.extract_strided_slice %107 {offsets = [0, 16], sizes = [8, 496], strides = [1, 1]} : vector<8x512xf32> to vector<8x496xf32>
    %172 = vector.extract_strided_slice %107 {offsets = [0, 0], sizes = [8, 16], strides = [1, 1]} : vector<8x512xf32> to vector<8x16xf32>
    %173 = tpu.concatenate %171, %172 in 1 : vector<8x496xf32>, vector<8x16xf32> -> vector<8x512xf32>
    %174 = vector.extract_strided_slice %1 {offsets = [7, 0], sizes = [1, 512], strides = [1, 1]} : vector<9x512xf32> to vector<1x512xf32>
    %175 = vector.broadcast %174 : vector<1x512xf32> to vector<8x512xf32>
    %176 = arith.mulf %173, %175 : vector<8x512xf32>
    %c7_68 = arith.constant 7 : index
    %c0_69 = arith.constant 0 : index
    %c0_70 = arith.constant 0 : index
    %177 = vector.load %arg3[%c7_68, %c0_69, %c0_70] : memref<9x8x8xf32, #tpu.memory_space<vmem>>, vector<1x8x8xf32>
    %178 = vector.shape_cast %177 : vector<1x8x8xf32> to vector<8x8xf32>
    %cst_71 = arith.constant dense<0.000000e+00> : vector<8x512xf32>
    %179 = tpu.matmul %178, %176, %cst_71 {dimension_numbers = #tpu.dot_dimension_numbers<[1], [0], [0], [1], [0, 0, 1, 1], [], []>} : vector<8x8xf32>, vector<8x512xf32>, vector<8x512xf32> -> vector<8x512xf32>
    %180 = arith.addf %170, %179 : vector<8x512xf32>
    %181 = vector.extract_strided_slice %107 {offsets = [0, 17], sizes = [8, 495], strides = [1, 1]} : vector<8x512xf32> to vector<8x495xf32>
    %182 = vector.extract_strided_slice %107 {offsets = [0, 0], sizes = [8, 17], strides = [1, 1]} : vector<8x512xf32> to vector<8x17xf32>
    %183 = tpu.concatenate %181, %182 in 1 : vector<8x495xf32>, vector<8x17xf32> -> vector<8x512xf32>
    %184 = vector.extract_strided_slice %1 {offsets = [8, 0], sizes = [1, 512], strides = [1, 1]} : vector<9x512xf32> to vector<1x512xf32>
    %185 = vector.broadcast %184 : vector<1x512xf32> to vector<8x512xf32>
    %186 = arith.mulf %183, %185 : vector<8x512xf32>
    %c8_72 = arith.constant 8 : index
    %c0_73 = arith.constant 0 : index
    %c0_74 = arith.constant 0 : index
    %187 = vector.load %arg3[%c8_72, %c0_73, %c0_74] : memref<9x8x8xf32, #tpu.memory_space<vmem>>, vector<1x8x8xf32>
    %188 = vector.shape_cast %187 : vector<1x8x8xf32> to vector<8x8xf32>
    %cst_75 = arith.constant dense<0.000000e+00> : vector<8x512xf32>
    %189 = tpu.matmul %188, %186, %cst_75 {dimension_numbers = #tpu.dot_dimension_numbers<[1], [0], [0], [1], [0, 0, 1, 1], [], []>} : vector<8x8xf32>, vector<8x512xf32>, vector<8x512xf32> -> vector<8x512xf32>
    %190 = arith.addf %180, %189 : vector<8x512xf32>
    %cst_76 = arith.constant dense<0.000000e+00> : vector<8xf32>
    %191 = vector.multi_reduction <add>, %190, %cst_76 [1] : vector<8x512xf32> to vector<8xf32>
    %192 = vector.shape_cast %191 : vector<8xf32> to vector<8x1xf32>
    %cst_77 = arith.constant 5.120000e+02 : f32
    %193 = vector.broadcast %cst_77 : f32 to vector<8x1xf32>
    %194 = arith.divf %192, %193 : vector<8x1xf32>
    %195 = vector.broadcast %194 : vector<8x1xf32> to vector<8x512xf32>
    %196 = arith.subf %190, %195 : vector<8x512xf32>
    %197 = arith.mulf %196, %196 : vector<8x512xf32>
    %cst_78 = arith.constant dense<0.000000e+00> : vector<8xf32>
    %198 = vector.multi_reduction <add>, %197, %cst_78 [1] : vector<8x512xf32> to vector<8xf32>
    %199 = vector.shape_cast %198 : vector<8xf32> to vector<8x1xf32>
    %cst_79 = arith.constant 5.120000e+02 : f32
    %200 = vector.broadcast %cst_79 : f32 to vector<8x1xf32>
    %201 = arith.divf %199, %200 : vector<8x1xf32>
    %c0_80 = arith.constant 0 : index
    %c0_81 = arith.constant 0 : index
    %202 = vector.load %arg6[%c0_80, %c0_81] : memref<8x1xf32, #tpu.memory_space<vmem>>, vector<8x1xf32>
    %cst_82 = arith.constant 9.99999974E-6 : f32
    %203 = vector.broadcast %cst_82 : f32 to vector<8x1xf32>
    %204 = arith.addf %201, %203 : vector<8x1xf32>
    %205 = math.rsqrt %204 : vector<8x1xf32>
    %206 = arith.mulf %202, %205 : vector<8x1xf32>
    %207 = vector.broadcast %206 : vector<8x1xf32> to vector<8x512xf32>
    %208 = arith.mulf %196, %207 : vector<8x512xf32>
    %c0_83 = arith.constant 0 : index
    %c0_84 = arith.constant 0 : index
    %209 = vector.load %arg7[%c0_83, %c0_84] : memref<8x1xf32, #tpu.memory_space<vmem>>, vector<8x1xf32>
    %210 = vector.broadcast %209 : vector<8x1xf32> to vector<8x512xf32>
    %211 = arith.addf %208, %210 : vector<8x512xf32>
    %cst_85 = arith.constant 0.000000e+00 : f32
    %212 = vector.broadcast %cst_85 : f32 to vector<8x512xf32>
    %213 = arith.maximumf %211, %212 : vector<8x512xf32>
    %c0_86 = arith.constant 0 : index
    %c0_87 = arith.constant 0 : index
    %214 = vector.load %arg9[%c0_86, %c0_87] : memref<8x512xf32, #tpu.memory_space<vmem>>, vector<8x512xf32>
    tpu.vector_store %arg9[%c0_86, %c0_87], %213 {strides = array<i32>} : memref<8x512xf32, #tpu.memory_space<vmem>>, vector<8x512xf32>,
    return
  }
  func.func @transform_0(%arg0: i32) -> (i32, i32) {
    %c0_i32 = arith.constant 0 : i32
    %c0_i32_0 = arith.constant 0 : i32
    %c0_i32_1 = arith.constant 0 : i32
    return %c0_i32, %c0_i32_0 : i32, i32
  }
  func.func @transform_1(%arg0: i32) -> (i32, i32, i32) {
    %c0_i32 = arith.constant 0 : i32
    %c0_i32_0 = arith.constant 0 : i32
    %c0_i32_1 = arith.constant 0 : i32
    %c0_i32_2 = arith.constant 0 : i32
    return %c0_i32, %c0_i32_0, %c0_i32_1 : i32, i32, i32
  }
  func.func @transform_2(%arg0: i32) -> (i32, i32, i32) {
    %c0_i32 = arith.constant 0 : i32
    %c0_i32_0 = arith.constant 0 : i32
    %c0_i32_1 = arith.constant 0 : i32
    %c0_i32_2 = arith.constant 0 : i32
    return %c0_i32, %c0_i32_0, %c0_i32_1 : i32, i32, i32
  }
  func.func @transform_3(%arg0: i32) -> (i32, i32) {
    %c0_i32 = arith.constant 0 : i32
    %c0_i32_0 = arith.constant 0 : i32
    %c0_i32_1 = arith.constant 0 : i32
    return %c0_i32, %c0_i32_0 : i32, i32
  }
  func.func @transform_4(%arg0: i32) -> (i32, i32) {
    %c0_i32 = arith.constant 0 : i32
    %c0_i32_0 = arith.constant 0 : i32
    %c0_i32_1 = arith.constant 0 : i32
    return %c0_i32, %c0_i32_0 : i32, i32
  }
  func.func @transform_5(%arg0: i32) -> (i32, i32) {
    %c0_i32 = arith.constant 0 : i32
    %c0_i32_0 = arith.constant 0 : i32
    %c0_i32_1 = arith.constant 0 : i32
    return %c0_i32, %c0_i32_0 : i32, i32
  }
  func.func @transform_6(%arg0: i32) -> (i32, i32) {
    %c0_i32 = arith.constant 0 : i32
    %c0_i32_0 = arith.constant 0 : i32
    %c0_i32_1 = arith.constant 0 : i32
    return %c0_i32, %c0_i32_0 : i32, i32
  }
  func.func @transform_7(%arg0: i32) -> (i32, i32) {
    %c0_i32 = arith.constant 0 : i32
    %c0_i32_0 = arith.constant 0 : i32
    %c0_i32_1 = arith.constant 0 : i32
    return %c0_i32, %c0_i32_0 : i32, i32
  }
  func.func @transform_8(%arg0: i32) -> (i32, i32) {
    %c0_i32 = arith.constant 0 : i32
    %c0_i32_0 = arith.constant 0 : i32
    %c0_i32_1 = arith.constant 0 : i32
    return %c0_i32, %c0_i32_0 : i32, i32
  }
}

</mosaic_0001>

<llo_original>
// kernel: encoder_block.1
$region0: #{encoder_block.1}
  #allocation0 [shape = 'u32[]', space=smem, size = 0x4, offset = 0x4, fixed_abs, tag = 'smem constant byte address 0x4 - core index']
  #allocation1 [shape = 'u32[72,128]{1,0:T(1,128)}', space=vmem, size = 0x9000, scoped, tag = 'internal scratch']
  %s0 = inlined_call_operand.vmem [shape: f32[8,512], index: 0, kind: input, shape index: {}]
  %s1 = inlined_call_operand.vmem [shape: f32[9,8,8], index: 1, kind: input, shape index: {}]
  %s2 = inlined_call_operand.vmem [shape: f32[9,8,8], index: 2, kind: input, shape index: {}]
  %s3 = inlined_call_operand.vmem [shape: f32[8,1], index: 3, kind: input, shape index: {}]
  %s4 = inlined_call_operand.vmem [shape: f32[8,1], index: 4, kind: input, shape index: {}]
  %s5 = inlined_call_operand.vmem [shape: f32[8,1], index: 5, kind: input, shape index: {}]
  %s6 = inlined_call_operand.vmem [shape: f32[8,1], index: 6, kind: input, shape index: {}]
  %s7 = inlined_call_operand.vmem [shape: f32[9,512], index: 7, kind: input, shape index: {}]
  %s8 = inlined_call_operand.vmem [shape: f32[8,512], index: 8, kind: output, shape index: {}]
  %s9 = sld [smem:[#allocation0]]
  $region42: #{encoder_block.1} parent=0
    _
  %s11 = ssub.s32 1, %s9
  %s12 = scalar_select 0, %s11, %s9
  // Predicated region
  $region2: #{encoder_block.1} parent=0 // pred_check
    _
  $region3: #{encoder_block.1} parent=0 // pred_check_branch
    %14 = sbr.rel (0) target = $region5
  $region4: #{encoder_block.1} parent=0 // pred_region
    _
  $region5: #{encoder_block.1} parent=0 // pred_fallthru
    _
  // Predicated region
  $region6: #{encoder_block.1} parent=0 // pred_check
    _
  $region7: #{encoder_block.1} parent=0 // pred_check_branch
    %16 = sbr.rel (0) target = $region9
  $region8: #{encoder_block.1} parent=0 // pred_region
    _
  $region9: #{encoder_block.1} parent=0 // pred_fallthru
    _
  // Predicated region
  $region10: #{encoder_block.1} parent=0 // pred_check
    _
  $region11: #{encoder_block.1} parent=0 // pred_check_branch
    %18 = sbr.rel (0) target = $region13
  $region12: #{encoder_block.1} parent=0 // pred_region
    _
  $region13: #{encoder_block.1} parent=0 // pred_fallthru
    _
  // Predicated region
  $region14: #{encoder_block.1} parent=0 // pred_check
    _
  $region15: #{encoder_block.1} parent=0 // pred_check_branch
    %20 = sbr.rel (0) target = $region17
  $region16: #{encoder_block.1} parent=0 // pred_region
    _
  $region17: #{encoder_block.1} parent=0 // pred_fallthru
    _
  // Predicated region
  $region18: #{encoder_block.1} parent=0 // pred_check
    _
  $region19: #{encoder_block.1} parent=0 // pred_check_branch
    %22 = sbr.rel (0) target = $region21
  $region20: #{encoder_block.1} parent=0 // pred_region
    _
  $region21: #{encoder_block.1} parent=0 // pred_fallthru
    _
  // Predicated region
  $region22: #{encoder_block.1} parent=0 // pred_check
    _
  $region23: #{encoder_block.1} parent=0 // pred_check_branch
    %24 = sbr.rel (0) target = $region25
  $region24: #{encoder_block.1} parent=0 // pred_region
    _
  $region25: #{encoder_block.1} parent=0 // pred_fallthru
    _
  // Predicated region
  $region26: #{encoder_block.1} parent=0 // pred_check
    _
  $region27: #{encoder_block.1} parent=0 // pred_check_branch
    %26 = sbr.rel (0) target = $region29
  $region28: #{encoder_block.1} parent=0 // pred_region
    _
  $region29: #{encoder_block.1} parent=0 // pred_fallthru
    _
  // Predicated region
  $region30: #{encoder_block.1} parent=0 // pred_check
    _
  $region31: #{encoder_block.1} parent=0 // pred_check_branch
    %28 = sbr.rel (0) target = $region33
  $region32: #{encoder_block.1} parent=0 // pred_region
    _
  $region33: #{encoder_block.1} parent=0 // pred_fallthru
    _
  %v29 = vld [vmem:[%s0] sm:$0xff]
  %v30 = vld [vmem:[%s0 + $0x8] sm:$0xff]
  %v31 = vld [vmem:[%s0 + $0x10] sm:$0xff]
  %v32 = vld [vmem:[%s0 + $0x18] sm:$0xff]
  %v33 = vld [vmem:[%s7] sm:$0xff]
  %v34 = vld [vmem:[%s7 + $0x8] sm:$0xff]
  %v35 = vld [vmem:[%s7 + $0x10] sm:$0xff]
  %v36 = vld [vmem:[%s7 + $0x18] sm:$0xff]
  %v37 = vld [vmem:[%s7 + $0x20] sm:$0x1]
  %v38 = vld [vmem:[%s7 + $0x28] sm:$0x1]
  %v39 = vld [vmem:[%s7 + $0x30] sm:$0x1]
  %v40 = vld [vmem:[%s7 + $0x38] sm:$0x1]
  %42 = vrot.lane.b32.xlu0 %v32, 17
  %v43 = vpop.permute.xlu0 %42
  %48 = vrot.lane.b32.xlu0 %v29, 17
  %v49 = vpop.permute.xlu0 %48
  %50 = vrot.lane.b32.xlu0 %v30, 17
  %v51 = vpop.permute.xlu0 %50
  %52 = vrot.lane.b32.xlu0 %v31, 17
  %v53 = vpop.permute.xlu0 %52
  %vm54 = vcmask 138240
  %v55 = vsel %vm54, %v49, %v51
  %v56 = vsel %vm54, %v51, %v53
  %v57 = vsel %vm54, %v53, %v43
  %v62 = vsel %vm54, %v43, %v49
  %v63 = vperm.slane %v33, 0
  %v64 = vperm.slane %v34, 0
  %v65 = vperm.slane %v35, 0
  %v66 = vperm.slane %v36, 0
  %v67 = vmul.f32 %v62, %v63
  %v68 = vmul.f32 %v55, %v64
  %v69 = vmul.f32 %v56, %v65
  %v70 = vmul.f32 %v57, %v66
  %v71 = vld [vmem:[%s1] sm:$0xff]
  %72 = vrot.lane.b32.xlu0 %v32, 16
  %v73 = vpop.permute.xlu0 %72
  %75 = vrot.lane.b32.xlu0 %v29, 16
  %v76 = vpop.permute.xlu0 %75
  %77 = vrot.lane.b32.xlu0 %v30, 16
  %v78 = vpop.permute.xlu0 %77
  %79 = vrot.lane.b32.xlu0 %v31, 16
  %v80 = vpop.permute.xlu0 %79
  %vm81 = vcmask 130048
  %v82 = vsel %vm81, %v76, %v78
  %v83 = vsel %vm81, %v78, %v80
  %v84 = vsel %vm81, %v80, %v73
  %v89 = vsel %vm81, %v73, %v76
  %v90 = vperm.slane %v33, 1
  %v91 = vperm.slane %v34, 1
  %v92 = vperm.slane %v35, 1
  %v93 = vperm.slane %v36, 1
  %v94 = vmul.f32 %v89, %v90
  %v95 = vmul.f32 %v82, %v91
  %v96 = vmul.f32 %v83, %v92
  %v97 = vmul.f32 %v84, %v93
  %s98 = scalar_lea.vmem %s1, 8
  %v99 = vld [vmem:[%s98] sm:$0xff]
  %vm100 = vcmask 64512
  %v102 = vsel %vm100, %v99, 0
  %104 = vmatpush.msra.mxu0 0.0
  %105 = vmatpush.msra.mxu0 0.0
  %106 = vmatpush.msra.mxu0 0.0
  %107 = vmatpush.msra.mxu0 0.0
  %108 = vmatpush.msra.mxu0 0.0
  %109 = vmatpush.msra.mxu0 0.0
  %110 = vmatpush.msra.mxu0 0.0
  %111 = vmatpush.msra.mxu0 0.0
  %112 = vmatpush.msra.mxu0 0.0
  %113 = vmatpush.msra.mxu0 0.0
  %114 = vmatpush.msra.mxu0 0.0
  %115 = vmatpush.msra.mxu0 0.0
  %116 = vmatpush.msra.mxu0 0.0
  %117 = vmatpush.msra.mxu0 0.0
  %118 = vmatpush.msra.mxu0 0.0
  %119 = vmatpush.msra.mxu0 %v94
  %120 = vmatmul.f32.gmra.mxu0 %v102
  %v121 = vpop.f32.mrf.mxu0
  %v122 = vadd.f32 0.0, %v121
  %123 = vdwg.mxu0
  %124 = vmatpush.msra.mxu0 0.0
  %125 = vmatpush.msra.mxu0 0.0
  %126 = vmatpush.msra.mxu0 0.0
  %127 = vmatpush.msra.mxu0 0.0
  %128 = vmatpush.msra.mxu0 0.0
  %129 = vmatpush.msra.mxu0 0.0
  %130 = vmatpush.msra.mxu0 0.0
  %131 = vmatpush.msra.mxu0 0.0
  %132 = vmatpush.msra.mxu0 0.0
  %133 = vmatpush.msra.mxu0 0.0
  %134 = vmatpush.msra.mxu0 0.0
  %135 = vmatpush.msra.mxu0 0.0
  %136 = vmatpush.msra.mxu0 0.0
  %137 = vmatpush.msra.mxu0 0.0
  %138 = vmatpush.msra.mxu0 0.0
  %139 = vmatpush.msra.mxu0 %v95
  %140 = vmatmul.f32.gmra.mxu0 %v102
  %v141 = vpop.f32.mrf.mxu0
  %v142 = vadd.f32 0.0, %v141
  %143 = vdwg.mxu0
  %144 = vmatpush.msra.mxu0 0.0
  %145 = vmatpush.msra.mxu0 0.0
  %146 = vmatpush.msra.mxu0 0.0
  %147 = vmatpush.msra.mxu0 0.0
  %148 = vmatpush.msra.mxu0 0.0
  %149 = vmatpush.msra.mxu0 0.0
  %150 = vmatpush.msra.mxu0 0.0
  %151 = vmatpush.msra.mxu0 0.0
  %152 = vmatpush.msra.mxu0 0.0
  %153 = vmatpush.msra.mxu0 0.0
  %154 = vmatpush.msra.mxu0 0.0
  %155 = vmatpush.msra.mxu0 0.0
  %156 = vmatpush.msra.mxu0 0.0
  %157 = vmatpush.msra.mxu0 0.0
  %158 = vmatpush.msra.mxu0 0.0
  %159 = vmatpush.msra.mxu0 %v96
  %160 = vmatmul.f32.gmra.mxu0 %v102
  %v161 = vpop.f32.mrf.mxu0
  %v162 = vadd.f32 0.0, %v161
  %163 = vdwg.mxu0
  %164 = vmatpush.msra.mxu0 0.0
  %165 = vmatpush.msra.mxu0 0.0
  %166 = vmatpush.msra.mxu0 0.0
  %167 = vmatpush.msra.mxu0 0.0
  %168 = vmatpush.msra.mxu0 0.0
  %169 = vmatpush.msra.mxu0 0.0
  %170 = vmatpush.msra.mxu0 0.0
  %171 = vmatpush.msra.mxu0 0.0
  %172 = vmatpush.msra.mxu0 0.0
  %173 = vmatpush.msra.mxu0 0.0
  %174 = vmatpush.msra.mxu0 0.0
  %175 = vmatpush.msra.mxu0 0.0
  %176 = vmatpush.msra.mxu0 0.0
  %177 = vmatpush.msra.mxu0 0.0
  %178 = vmatpush.msra.mxu0 0.0
  %179 = vmatpush.msra.mxu0 %v97
  %180 = vmatmul.f32.gmra.mxu0 %v102
  %v181 = vpop.f32.mrf.mxu0
  %v182 = vadd.f32 0.0, %v181
  %183 = vdwg.mxu0
  %v185 = vsel %vm100, %v71, 0
  %187 = vmatpush.msra.mxu0 0.0
  %188 = vmatpush.msra.mxu0 0.0
  %189 = vmatpush.msra.mxu0 0.0
  %190 = vmatpush.msra.mxu0 0.0
  %191 = vmatpush.msra.mxu0 0.0
  %192 = vmatpush.msra.mxu0 0.0
  %193 = vmatpush.msra.mxu0 0.0
  %194 = vmatpush.msra.mxu0 0.0
  %195 = vmatpush.msra.mxu0 0.0
  %196 = vmatpush.msra.mxu0 0.0
  %197 = vmatpush.msra.mxu0 0.0
  %198 = vmatpush.msra.mxu0 0.0
  %199 = vmatpush.msra.mxu0 0.0
  %200 = vmatpush.msra.mxu0 0.0
  %201 = vmatpush.msra.mxu0 0.0
  %202 = vmatpush.msra.mxu0 %v67
  %203 = vmatmul.f32.gmra.mxu0 %v185
  %v204 = vpop.f32.mrf.mxu0
  %v205 = vadd.f32 %v122, %v204
  %206 = vdwg.mxu0
  %207 = vmatpush.msra.mxu0 0.0
  %208 = vmatpush.msra.mxu0 0.0
  %209 = vmatpush.msra.mxu0 0.0
  %210 = vmatpush.msra.mxu0 0.0
  %211 = vmatpush.msra.mxu0 0.0
  %212 = vmatpush.msra.mxu0 0.0
  %213 = vmatpush.msra.mxu0 0.0
  %214 = vmatpush.msra.mxu0 0.0
  %215 = vmatpush.msra.mxu0 0.0
  %216 = vmatpush.msra.mxu0 0.0
  %217 = vmatpush.msra.mxu0 0.0
  %218 = vmatpush.msra.mxu0 0.0
  %219 = vmatpush.msra.mxu0 0.0
  %220 = vmatpush.msra.mxu0 0.0
  %221 = vmatpush.msra.mxu0 0.0
  %222 = vmatpush.msra.mxu0 %v68
  %223 = vmatmul.f32.gmra.mxu0 %v185
  %v224 = vpop.f32.mrf.mxu0
  %v225 = vadd.f32 %v142, %v224
  %226 = vdwg.mxu0
  %227 = vmatpush.msra.mxu0 0.0
  %228 = vmatpush.msra.mxu0 0.0
  %229 = vmatpush.msra.mxu0 0.0
  %230 = vmatpush.msra.mxu0 0.0
  %231 = vmatpush.msra.mxu0 0.0
  %232 = vmatpush.msra.mxu0 0.0
  %233 = vmatpush.msra.mxu0 0.0
  %234 = vmatpush.msra.mxu0 0.0
  %235 = vmatpush.msra.mxu0 0.0
  %236 = vmatpush.msra.mxu0 0.0
  %237 = vmatpush.msra.mxu0 0.0
  %238 = vmatpush.msra.mxu0 0.0
  %239 = vmatpush.msra.mxu0 0.0
  %240 = vmatpush.msra.mxu0 0.0
  %241 = vmatpush.msra.mxu0 0.0
  %242 = vmatpush.msra.mxu0 %v69
  %243 = vmatmul.f32.gmra.mxu0 %v185
  %v244 = vpop.f32.mrf.mxu0
  %v245 = vadd.f32 %v162, %v244
  %246 = vdwg.mxu0
  %247 = vmatpush.msra.mxu0 0.0
  %248 = vmatpush.msra.mxu0 0.0
  %249 = vmatpush.msra.mxu0 0.0
  %250 = vmatpush.msra.mxu0 0.0
  %251 = vmatpush.msra.mxu0 0.0
  %252 = vmatpush.msra.mxu0 0.0
  %253 = vmatpush.msra.mxu0 0.0
  %254 = vmatpush.msra.mxu0 0.0
  %255 = vmatpush.msra.mxu0 0.0
  %256 = vmatpush.msra.mxu0 0.0
  %257 = vmatpush.msra.mxu0 0.0
  %258 = vmatpush.msra.mxu0 0.0
  %259 = vmatpush.msra.mxu0 0.0
  %260 = vmatpush.msra.mxu0 0.0
  %261 = vmatpush.msra.mxu0 0.0
  %262 = vmatpush.msra.mxu0 %v70
  %263 = vmatmul.f32.gmra.mxu0 %v185
  %v264 = vpop.f32.mrf.mxu0
  %v265 = vadd.f32 %v182, %v264
  %266 = vdwg.mxu0
  %267 = vrot.lane.b32.xlu0 %v32, 15
  %v268 = vpop.permute.xlu0 %267
  %270 = vrot.lane.b32.xlu0 %v29, 15
  %v271 = vpop.permute.xlu0 %270
  %272 = vrot.lane.b32.xlu0 %v30, 15
  %v273 = vpop.permute.xlu0 %272
  %274 = vrot.lane.b32.xlu0 %v31, 15
  %v275 = vpop.permute.xlu0 %274
  %vm276 = vcmask 121856
  %v277 = vsel %vm276, %v271, %v273
  %v278 = vsel %vm276, %v273, %v275
  %v279 = vsel %vm276, %v275, %v268
  %v284 = vsel %vm276, %v268, %v271
  %v285 = vperm.slane %v33, 2
  %v286 = vperm.slane %v34, 2
  %v287 = vperm.slane %v35, 2
  %v288 = vperm.slane %v36, 2
  %v289 = vmul.f32 %v284, %v285
  %v290 = vmul.f32 %v277, %v286
  %v291 = vmul.f32 %v278, %v287
  %v292 = vmul.f32 %v279, %v288
  %s293 = scalar_lea.vmem %s1, 16
  %v294 = vld [vmem:[%s293] sm:$0xff]
  %v296 = vsel %vm100, %v294, 0
  %298 = vmatpush.msra.mxu0 0.0
  %299 = vmatpush.msra.mxu0 0.0
  %300 = vmatpush.msra.mxu0 0.0
  %301 = vmatpush.msra.mxu0 0.0
  %302 = vmatpush.msra.mxu0 0.0
  %303 = vmatpush.msra.mxu0 0.0
  %304 = vmatpush.msra.mxu0 0.0
  %305 = vmatpush.msra.mxu0 0.0
  %306 = vmatpush.msra.mxu0 0.0
  %307 = vmatpush.msra.mxu0 0.0
  %308 = vmatpush.msra.mxu0 0.0
  %309 = vmatpush.msra.mxu0 0.0
  %310 = vmatpush.msra.mxu0 0.0
  %311 = vmatpush.msra.mxu0 0.0
  %312 = vmatpush.msra.mxu0 0.0
  %313 = vmatpush.msra.mxu0 %v289
  %314 = vmatmul.f32.gmra.mxu0 %v296
  %v315 = vpop.f32.mrf.mxu0
  %v316 = vadd.f32 0.0, %v315
  %317 = vdwg.mxu0
  %318 = vmatpush.msra.mxu0 0.0
  %319 = vmatpush.msra.mxu0 0.0
  %320 = vmatpush.msra.mxu0 0.0
  %321 = vmatpush.msra.mxu0 0.0
  %322 = vmatpush.msra.mxu0 0.0
  %323 = vmatpush.msra.mxu0 0.0
  %324 = vmatpush.msra.mxu0 0.0
  %325 = vmatpush.msra.mxu0 0.0
  %326 = vmatpush.msra.mxu0 0.0
  %327 = vmatpush.msra.mxu0 0.0
  %328 = vmatpush.msra.mxu0 0.0
  %329 = vmatpush.msra.mxu0 0.0
  %330 = vmatpush.msra.mxu0 0.0
  %331 = vmatpush.msra.mxu0 0.0
  %332 = vmatpush.msra.mxu0 0.0
  %333 = vmatpush.msra.mxu0 %v290
  %334 = vmatmul.f32.gmra.mxu0 %v296
  %v335 = vpop.f32.mrf.mxu0
  %v336 = vadd.f32 0.0, %v335
  %337 = vdwg.mxu0
  %338 = vmatpush.msra.mxu0 0.0
  %339 = vmatpush.msra.mxu0 0.0
  %340 = vmatpush.msra.mxu0 0.0
  %341 = vmatpush.msra.mxu0 0.0
  %342 = vmatpush.msra.mxu0 0.0
  %343 = vmatpush.msra.mxu0 0.0
  %344 = vmatpush.msra.mxu0 0.0
  %345 = vmatpush.msra.mxu0 0.0
  %346 = vmatpush.msra.mxu0 0.0
  %347 = vmatpush.msra.mxu0 0.0
  %348 = vmatpush.msra.mxu0 0.0
  %349 = vmatpush.msra.mxu0 0.0
  %350 = vmatpush.msra.mxu0 0.0
  %351 = vmatpush.msra.mxu0 0.0
  %352 = vmatpush.msra.mxu0 0.0
  %353 = vmatpush.msra.mxu0 %v291
  %354 = vmatmul.f32.gmra.mxu0 %v296
  %v355 = vpop.f32.mrf.mxu0
  %v356 = vadd.f32 0.0, %v355
  %357 = vdwg.mxu0
  %358 = vmatpush.msra.mxu0 0.0
  %359 = vmatpush.msra.mxu0 0.0
  %360 = vmatpush.msra.mxu0 0.0
  %361 = vmatpush.msra.mxu0 0.0
  %362 = vmatpush.msra.mxu0 0.0
  %363 = vmatpush.msra.mxu0 0.0
  %364 = vmatpush.msra.mxu0 0.0
  %365 = vmatpush.msra.mxu0 0.0
  %366 = vmatpush.msra.mxu0 0.0
  %367 = vmatpush.msra.mxu0 0.0
  %368 = vmatpush.msra.mxu0 0.0
  %369 = vmatpush.msra.mxu0 0.0
  %370 = vmatpush.msra.mxu0 0.0
  %371 = vmatpush.msra.mxu0 0.0
  %372 = vmatpush.msra.mxu0 0.0
  %373 = vmatpush.msra.mxu0 %v292
  %374 = vmatmul.f32.gmra.mxu0 %v296
  %v375 = vpop.f32.mrf.mxu0
  %v376 = vadd.f32 0.0, %v375
  %377 = vdwg.mxu0
  %v378 = vadd.f32 %v205, %v316
  %v379 = vadd.f32 %v225, %v336
  %v380 = vadd.f32 %v245, %v356
  %v381 = vadd.f32 %v265, %v376
  %382 = vrot.lane.b32.xlu0 %v32, 1
  %v383 = vpop.permute.xlu0 %382
  %385 = vrot.lane.b32.xlu0 %v29, 1
  %v386 = vpop.permute.xlu0 %385
  %387 = vrot.lane.b32.xlu0 %v30, 1
  %v388 = vpop.permute.xlu0 %387
  %389 = vrot.lane.b32.xlu0 %v31, 1
  %v390 = vpop.permute.xlu0 %389
  %vm391 = vcmask 7168
  %v392 = vsel %vm391, %v386, %v388
  %v393 = vsel %vm391, %v388, %v390
  %v394 = vsel %vm391, %v390, %v383
  %v399 = vsel %vm391, %v383, %v386
  %v400 = vperm.slane %v33, 3
  %v401 = vperm.slane %v34, 3
  %v402 = vperm.slane %v35, 3
  %v403 = vperm.slane %v36, 3
  %v404 = vmul.f32 %v399, %v400
  %v405 = vmul.f32 %v392, %v401
  %v406 = vmul.f32 %v393, %v402
  %v407 = vmul.f32 %v394, %v403
  %s408 = scalar_lea.vmem %s1, 24
  %v409 = vld [vmem:[%s408] sm:$0xff]
  %v411 = vsel %vm100, %v409, 0
  %413 = vmatpush.msra.mxu0 0.0
  %414 = vmatpush.msra.mxu0 0.0
  %415 = vmatpush.msra.mxu0 0.0
  %416 = vmatpush.msra.mxu0 0.0
  %417 = vmatpush.msra.mxu0 0.0
  %418 = vmatpush.msra.mxu0 0.0
  %419 = vmatpush.msra.mxu0 0.0
  %420 = vmatpush.msra.mxu0 0.0
  %421 = vmatpush.msra.mxu0 0.0
  %422 = vmatpush.msra.mxu0 0.0
  %423 = vmatpush.msra.mxu0 0.0
  %424 = vmatpush.msra.mxu0 0.0
  %425 = vmatpush.msra.mxu0 0.0
  %426 = vmatpush.msra.mxu0 0.0
  %427 = vmatpush.msra.mxu0 0.0
  %428 = vmatpush.msra.mxu0 %v404
  %429 = vmatmul.f32.gmra.mxu0 %v411
  %v430 = vpop.f32.mrf.mxu0
  %v431 = vadd.f32 0.0, %v430
  %432 = vdwg.mxu0
  %433 = vmatpush.msra.mxu0 0.0
  %434 = vmatpush.msra.mxu0 0.0
  %435 = vmatpush.msra.mxu0 0.0
  %436 = vmatpush.msra.mxu0 0.0
  %437 = vmatpush.msra.mxu0 0.0
  %438 = vmatpush.msra.mxu0 0.0
  %439 = vmatpush.msra.mxu0 0.0
  %440 = vmatpush.msra.mxu0 0.0
  %441 = vmatpush.msra.mxu0 0.0
  %442 = vmatpush.msra.mxu0 0.0
  %443 = vmatpush.msra.mxu0 0.0
  %444 = vmatpush.msra.mxu0 0.0
  %445 = vmatpush.msra.mxu0 0.0
  %446 = vmatpush.msra.mxu0 0.0
  %447 = vmatpush.msra.mxu0 0.0
  %448 = vmatpush.msra.mxu0 %v405
  %449 = vmatmul.f32.gmra.mxu0 %v411
  %v450 = vpop.f32.mrf.mxu0
  %v451 = vadd.f32 0.0, %v450
  %452 = vdwg.mxu0
  %453 = vmatpush.msra.mxu0 0.0
  %454 = vmatpush.msra.mxu0 0.0
  %455 = vmatpush.msra.mxu0 0.0
  %456 = vmatpush.msra.mxu0 0.0
  %457 = vmatpush.msra.mxu0 0.0
  %458 = vmatpush.msra.mxu0 0.0
  %459 = vmatpush.msra.mxu0 0.0
  %460 = vmatpush.msra.mxu0 0.0
  %461 = vmatpush.msra.mxu0 0.0
  %462 = vmatpush.msra.mxu0 0.0
  %463 = vmatpush.msra.mxu0 0.0
  %464 = vmatpush.msra.mxu0 0.0
  %465 = vmatpush.msra.mxu0 0.0
  %466 = vmatpush.msra.mxu0 0.0
  %467 = vmatpush.msra.mxu0 0.0
  %468 = vmatpush.msra.mxu0 %v406
  %469 = vmatmul.f32.gmra.mxu0 %v411
  %v470 = vpop.f32.mrf.mxu0
  %v471 = vadd.f32 0.0, %v470
  %472 = vdwg.mxu0
  %473 = vmatpush.msra.mxu0 0.0
  %474 = vmatpush.msra.mxu0 0.0
  %475 = vmatpush.msra.mxu0 0.0
  %476 = vmatpush.msra.mxu0 0.0
  %477 = vmatpush.msra.mxu0 0.0
  %478 = vmatpush.msra.mxu0 0.0
  %479 = vmatpush.msra.mxu0 0.0
  %480 = vmatpush.msra.mxu0 0.0
  %481 = vmatpush.msra.mxu0 0.0
  %482 = vmatpush.msra.mxu0 0.0
  %483 = vmatpush.msra.mxu0 0.0
  %484 = vmatpush.msra.mxu0 0.0
  %485 = vmatpush.msra.mxu0 0.0
  %486 = vmatpush.msra.mxu0 0.0
  %487 = vmatpush.msra.mxu0 0.0
  %488 = vmatpush.msra.mxu0 %v407
  %489 = vmatmul.f32.gmra.mxu0 %v411
  %v490 = vpop.f32.mrf.mxu0
  %v491 = vadd.f32 0.0, %v490
  %492 = vdwg.mxu0
  %v493 = vadd.f32 %v378, %v431
  %v494 = vadd.f32 %v379, %v451
  %v495 = vadd.f32 %v380, %v471
  %v496 = vadd.f32 %v381, %v491
  %s497 = scalar_lea.vmem %s1, 32
  %v498 = vld [vmem:[%s497] sm:$0xff]
  %v500 = vsel %vm100, %v498, 0
  %502 = vmatpush.msra.mxu0 0.0
  %503 = vmatpush.msra.mxu0 0.0
  %504 = vmatpush.msra.mxu0 0.0
  %505 = vmatpush.msra.mxu0 0.0
  %506 = vmatpush.msra.mxu0 0.0
  %507 = vmatpush.msra.mxu0 0.0
  %508 = vmatpush.msra.mxu0 0.0
  %509 = vmatpush.msra.mxu0 0.0
  %510 = vmatpush.msra.mxu0 0.0
  %511 = vmatpush.msra.mxu0 0.0
  %512 = vmatpush.msra.mxu0 0.0
  %513 = vmatpush.msra.mxu0 0.0
  %514 = vmatpush.msra.mxu0 0.0
  %515 = vmatpush.msra.mxu0 0.0
  %516 = vmatpush.msra.mxu0 0.0
  %517 = vmatpush.msra.mxu0 %v29
  %518 = vmatmul.f32.gmra.mxu0 %v500
  %v519 = vpop.f32.mrf.mxu0
  %v520 = vadd.f32 0.0, %v519
  %521 = vdwg.mxu0
  %522 = vmatpush.msra.mxu0 0.0
  %523 = vmatpush.msra.mxu0 0.0
  %524 = vmatpush.msra.mxu0 0.0
  %525 = vmatpush.msra.mxu0 0.0
  %526 = vmatpush.msra.mxu0 0.0
  %527 = vmatpush.msra.mxu0 0.0
  %528 = vmatpush.msra.mxu0 0.0
  %529 = vmatpush.msra.mxu0 0.0
  %530 = vmatpush.msra.mxu0 0.0
  %531 = vmatpush.msra.mxu0 0.0
  %532 = vmatpush.msra.mxu0 0.0
  %533 = vmatpush.msra.mxu0 0.0
  %534 = vmatpush.msra.mxu0 0.0
  %535 = vmatpush.msra.mxu0 0.0
  %536 = vmatpush.msra.mxu0 0.0
  %537 = vmatpush.msra.mxu0 %v30
  %538 = vmatmul.f32.gmra.mxu0 %v500
  %v539 = vpop.f32.mrf.mxu0
  %v540 = vadd.f32 0.0, %v539
  %541 = vdwg.mxu0
  %542 = vmatpush.msra.mxu0 0.0
  %543 = vmatpush.msra.mxu0 0.0
  %544 = vmatpush.msra.mxu0 0.0
  %545 = vmatpush.msra.mxu0 0.0
  %546 = vmatpush.msra.mxu0 0.0
  %547 = vmatpush.msra.mxu0 0.0
  %548 = vmatpush.msra.mxu0 0.0
  %549 = vmatpush.msra.mxu0 0.0
  %550 = vmatpush.msra.mxu0 0.0
  %551 = vmatpush.msra.mxu0 0.0
  %552 = vmatpush.msra.mxu0 0.0
  %553 = vmatpush.msra.mxu0 0.0
  %554 = vmatpush.msra.mxu0 0.0
  %555 = vmatpush.msra.mxu0 0.0
  %556 = vmatpush.msra.mxu0 0.0
  %557 = vmatpush.msra.mxu0 %v31
  %558 = vmatmul.f32.gmra.mxu0 %v500
  %v559 = vpop.f32.mrf.mxu0
  %v560 = vadd.f32 0.0, %v559
  %561 = vdwg.mxu0
  %562 = vmatpush.msra.mxu0 0.0
  %563 = vmatpush.msra.mxu0 0.0
  %564 = vmatpush.msra.mxu0 0.0
  %565 = vmatpush.msra.mxu0 0.0
  %566 = vmatpush.msra.mxu0 0.0
  %567 = vmatpush.msra.mxu0 0.0
  %568 = vmatpush.msra.mxu0 0.0
  %569 = vmatpush.msra.mxu0 0.0
  %570 = vmatpush.msra.mxu0 0.0
  %571 = vmatpush.msra.mxu0 0.0
  %572 = vmatpush.msra.mxu0 0.0
  %573 = vmatpush.msra.mxu0 0.0
  %574 = vmatpush.msra.mxu0 0.0
  %575 = vmatpush.msra.mxu0 0.0
  %576 = vmatpush.msra.mxu0 0.0
  %577 = vmatpush.msra.mxu0 %v32
  %578 = vmatmul.f32.gmra.mxu0 %v500
  %v579 = vpop.f32.mrf.mxu0
  %v580 = vadd.f32 0.0, %v579
  %581 = vdwg.mxu0
  %v582 = vadd.f32 %v493, %v520
  %v583 = vadd.f32 %v494, %v540
  %v584 = vadd.f32 %v495, %v560
  %v585 = vadd.f32 %v496, %v580
  %586 = vrot.lane.b32.xlu0 %v29, 127
  %v587 = vpop.permute.xlu0 %586
  %588 = vrot.lane.b32.xlu0 %v30, 127
  %v589 = vpop.permute.xlu0 %588
  %590 = vrot.lane.b32.xlu0 %v31, 127
  %v591 = vpop.permute.xlu0 %590
  %592 = vrot.lane.b32.xlu0 %v32, 127
  %v593 = vpop.permute.xlu0 %592
  %vm594 = vcmask 1039360
  %v595 = vsel %vm594, %v587, %v589
  %v596 = vsel %vm594, %v589, %v591
  %v597 = vsel %vm594, %v591, %v593
  %v603 = vsel %vm594, %v593, %v587
  %v604 = vperm.slane %v33, 5
  %v605 = vperm.slane %v34, 5
  %v606 = vperm.slane %v35, 5
  %v607 = vperm.slane %v36, 5
  %v608 = vmul.f32 %v595, %v604
  %v609 = vmul.f32 %v596, %v605
  %v610 = vmul.f32 %v597, %v606
  %v611 = vmul.f32 %v603, %v607
  %s612 = scalar_lea.vmem %s1, 40
  %v613 = vld [vmem:[%s612] sm:$0xff]
  %v615 = vsel %vm100, %v613, 0
  %617 = vmatpush.msra.mxu0 0.0
  %618 = vmatpush.msra.mxu0 0.0
  %619 = vmatpush.msra.mxu0 0.0
  %620 = vmatpush.msra.mxu0 0.0
  %621 = vmatpush.msra.mxu0 0.0
  %622 = vmatpush.msra.mxu0 0.0
  %623 = vmatpush.msra.mxu0 0.0
  %624 = vmatpush.msra.mxu0 0.0
  %625 = vmatpush.msra.mxu0 0.0
  %626 = vmatpush.msra.mxu0 0.0
  %627 = vmatpush.msra.mxu0 0.0
  %628 = vmatpush.msra.mxu0 0.0
  %629 = vmatpush.msra.mxu0 0.0
  %630 = vmatpush.msra.mxu0 0.0
  %631 = vmatpush.msra.mxu0 0.0
  %632 = vmatpush.msra.mxu0 %v608
  %633 = vmatmul.f32.gmra.mxu0 %v615
  %v634 = vpop.f32.mrf.mxu0
  %v635 = vadd.f32 0.0, %v634
  %636 = vdwg.mxu0
  %637 = vmatpush.msra.mxu0 0.0
  %638 = vmatpush.msra.mxu0 0.0
  %639 = vmatpush.msra.mxu0 0.0
  %640 = vmatpush.msra.mxu0 0.0
  %641 = vmatpush.msra.mxu0 0.0
  %642 = vmatpush.msra.mxu0 0.0
  %643 = vmatpush.msra.mxu0 0.0
  %644 = vmatpush.msra.mxu0 0.0
  %645 = vmatpush.msra.mxu0 0.0
  %646 = vmatpush.msra.mxu0 0.0
  %647 = vmatpush.msra.mxu0 0.0
  %648 = vmatpush.msra.mxu0 0.0
  %649 = vmatpush.msra.mxu0 0.0
  %650 = vmatpush.msra.mxu0 0.0
  %651 = vmatpush.msra.mxu0 0.0
  %652 = vmatpush.msra.mxu0 %v609
  %653 = vmatmul.f32.gmra.mxu0 %v615
  %v654 = vpop.f32.mrf.mxu0
  %v655 = vadd.f32 0.0, %v654
  %656 = vdwg.mxu0
  %657 = vmatpush.msra.mxu0 0.0
  %658 = vmatpush.msra.mxu0 0.0
  %659 = vmatpush.msra.mxu0 0.0
  %660 = vmatpush.msra.mxu0 0.0
  %661 = vmatpush.msra.mxu0 0.0
  %662 = vmatpush.msra.mxu0 0.0
  %663 = vmatpush.msra.mxu0 0.0
  %664 = vmatpush.msra.mxu0 0.0
  %665 = vmatpush.msra.mxu0 0.0
  %666 = vmatpush.msra.mxu0 0.0
  %667 = vmatpush.msra.mxu0 0.0
  %668 = vmatpush.msra.mxu0 0.0
  %669 = vmatpush.msra.mxu0 0.0
  %670 = vmatpush.msra.mxu0 0.0
  %671 = vmatpush.msra.mxu0 0.0
  %672 = vmatpush.msra.mxu0 %v610
  %673 = vmatmul.f32.gmra.mxu0 %v615
  %v674 = vpop.f32.mrf.mxu0
  %v675 = vadd.f32 0.0, %v674
  %676 = vdwg.mxu0
  %677 = vmatpush.msra.mxu0 0.0
  %678 = vmatpush.msra.mxu0 0.0
  %679 = vmatpush.msra.mxu0 0.0
  %680 = vmatpush.msra.mxu0 0.0
  %681 = vmatpush.msra.mxu0 0.0
  %682 = vmatpush.msra.mxu0 0.0
  %683 = vmatpush.msra.mxu0 0.0
  %684 = vmatpush.msra.mxu0 0.0
  %685 = vmatpush.msra.mxu0 0.0
  %686 = vmatpush.msra.mxu0 0.0
  %687 = vmatpush.msra.mxu0 0.0
  %688 = vmatpush.msra.mxu0 0.0
  %689 = vmatpush.msra.mxu0 0.0
  %690 = vmatpush.msra.mxu0 0.0
  %691 = vmatpush.msra.mxu0 0.0
  %692 = vmatpush.msra.mxu0 %v611
  %693 = vmatmul.f32.gmra.mxu0 %v615
  %v694 = vpop.f32.mrf.mxu0
  %v695 = vadd.f32 0.0, %v694
  %696 = vdwg.mxu0
  %v697 = vadd.f32 %v582, %v635
  %v698 = vadd.f32 %v583, %v655
  %v699 = vadd.f32 %v584, %v675
  %v700 = vadd.f32 %v585, %v695
  %701 = vrot.lane.b32.xlu0 %v29, 113
  %v702 = vpop.permute.xlu0 %701
  %703 = vrot.lane.b32.xlu0 %v30, 113
  %v704 = vpop.permute.xlu0 %703
  %705 = vrot.lane.b32.xlu0 %v31, 113
  %v706 = vpop.permute.xlu0 %705
  %707 = vrot.lane.b32.xlu0 %v32, 113
  %v708 = vpop.permute.xlu0 %707
  %vm709 = vcmask 924672
  %v710 = vsel %vm709, %v702, %v704
  %v711 = vsel %vm709, %v704, %v706
  %v712 = vsel %vm709, %v706, %v708
  %v718 = vsel %vm709, %v708, %v702
  %v719 = vperm.slane %v33, 6
  %v720 = vperm.slane %v34, 6
  %v721 = vperm.slane %v35, 6
  %v722 = vperm.slane %v36, 6
  %v723 = vmul.f32 %v710, %v719
  %v724 = vmul.f32 %v711, %v720
  %v725 = vmul.f32 %v712, %v721
  %v726 = vmul.f32 %v718, %v722
  %s727 = scalar_lea.vmem %s1, 48
  %v728 = vld [vmem:[%s727] sm:$0xff]
  %v730 = vsel %vm100, %v728, 0
  %732 = vmatpush.msra.mxu0 0.0
  %733 = vmatpush.msra.mxu0 0.0
  %734 = vmatpush.msra.mxu0 0.0
  %735 = vmatpush.msra.mxu0 0.0
  %736 = vmatpush.msra.mxu0 0.0
  %737 = vmatpush.msra.mxu0 0.0
  %738 = vmatpush.msra.mxu0 0.0
  %739 = vmatpush.msra.mxu0 0.0
  %740 = vmatpush.msra.mxu0 0.0
  %741 = vmatpush.msra.mxu0 0.0
  %742 = vmatpush.msra.mxu0 0.0
  %743 = vmatpush.msra.mxu0 0.0
  %744 = vmatpush.msra.mxu0 0.0
  %745 = vmatpush.msra.mxu0 0.0
  %746 = vmatpush.msra.mxu0 0.0
  %747 = vmatpush.msra.mxu0 %v723
  %748 = vmatmul.f32.gmra.mxu0 %v730
  %v749 = vpop.f32.mrf.mxu0
  %v750 = vadd.f32 0.0, %v749
  %751 = vdwg.mxu0
  %752 = vmatpush.msra.mxu0 0.0
  %753 = vmatpush.msra.mxu0 0.0
  %754 = vmatpush.msra.mxu0 0.0
  %755 = vmatpush.msra.mxu0 0.0
  %756 = vmatpush.msra.mxu0 0.0
  %757 = vmatpush.msra.mxu0 0.0
  %758 = vmatpush.msra.mxu0 0.0
  %759 = vmatpush.msra.mxu0 0.0
  %760 = vmatpush.msra.mxu0 0.0
  %761 = vmatpush.msra.mxu0 0.0
  %762 = vmatpush.msra.mxu0 0.0
  %763 = vmatpush.msra.mxu0 0.0
  %764 = vmatpush.msra.mxu0 0.0
  %765 = vmatpush.msra.mxu0 0.0
  %766 = vmatpush.msra.mxu0 0.0
  %767 = vmatpush.msra.mxu0 %v724
  %768 = vmatmul.f32.gmra.mxu0 %v730
  %v769 = vpop.f32.mrf.mxu0
  %v770 = vadd.f32 0.0, %v769
  %771 = vdwg.mxu0
  %772 = vmatpush.msra.mxu0 0.0
  %773 = vmatpush.msra.mxu0 0.0
  %774 = vmatpush.msra.mxu0 0.0
  %775 = vmatpush.msra.mxu0 0.0
  %776 = vmatpush.msra.mxu0 0.0
  %777 = vmatpush.msra.mxu0 0.0
  %778 = vmatpush.msra.mxu0 0.0
  %779 = vmatpush.msra.mxu0 0.0
  %780 = vmatpush.msra.mxu0 0.0
  %781 = vmatpush.msra.mxu0 0.0
  %782 = vmatpush.msra.mxu0 0.0
  %783 = vmatpush.msra.mxu0 0.0
  %784 = vmatpush.msra.mxu0 0.0
  %785 = vmatpush.msra.mxu0 0.0
  %786 = vmatpush.msra.mxu0 0.0
  %787 = vmatpush.msra.mxu0 %v725
  %788 = vmatmul.f32.gmra.mxu0 %v730
  %v789 = vpop.f32.mrf.mxu0
  %v790 = vadd.f32 0.0, %v789
  %791 = vdwg.mxu0
  %792 = vmatpush.msra.mxu0 0.0
  %793 = vmatpush.msra.mxu0 0.0
  %794 = vmatpush.msra.mxu0 0.0
  %795 = vmatpush.msra.mxu0 0.0
  %796 = vmatpush.msra.mxu0 0.0
  %797 = vmatpush.msra.mxu0 0.0
  %798 = vmatpush.msra.mxu0 0.0
  %799 = vmatpush.msra.mxu0 0.0
  %800 = vmatpush.msra.mxu0 0.0
  %801 = vmatpush.msra.mxu0 0.0
  %802 = vmatpush.msra.mxu0 0.0
  %803 = vmatpush.msra.mxu0 0.0
  %804 = vmatpush.msra.mxu0 0.0
  %805 = vmatpush.msra.mxu0 0.0
  %806 = vmatpush.msra.mxu0 0.0
  %807 = vmatpush.msra.mxu0 %v726
  %808 = vmatmul.f32.gmra.mxu0 %v730
  %v809 = vpop.f32.mrf.mxu0
  %v810 = vadd.f32 0.0, %v809
  %811 = vdwg.mxu0
  %v812 = vadd.f32 %v697, %v750
  %v813 = vadd.f32 %v698, %v770
  %v814 = vadd.f32 %v699, %v790
  %v815 = vadd.f32 %v700, %v810
  %816 = vrot.lane.b32.xlu0 %v29, 112
  %v817 = vpop.permute.xlu0 %816
  %818 = vrot.lane.b32.xlu0 %v30, 112
  %v819 = vpop.permute.xlu0 %818
  %820 = vrot.lane.b32.xlu0 %v31, 112
  %v821 = vpop.permute.xlu0 %820
  %822 = vrot.lane.b32.xlu0 %v32, 112
  %v823 = vpop.permute.xlu0 %822
  %vm824 = vcmask 916480
  %v825 = vsel %vm824, %v817, %v819
  %v826 = vsel %vm824, %v819, %v821
  %v827 = vsel %vm824, %v821, %v823
  %v833 = vsel %vm824, %v823, %v817
  %v834 = vperm.slane %v33, 7
  %v835 = vperm.slane %v34, 7
  %v836 = vperm.slane %v35, 7
  %v837 = vperm.slane %v36, 7
  %v838 = vmul.f32 %v825, %v834
  %v839 = vmul.f32 %v826, %v835
  %v840 = vmul.f32 %v827, %v836
  %v841 = vmul.f32 %v833, %v837
  %s842 = scalar_lea.vmem %s1, 56
  %v843 = vld [vmem:[%s842] sm:$0xff]
  %v845 = vsel %vm100, %v843, 0
  %847 = vmatpush.msra.mxu0 0.0
  %848 = vmatpush.msra.mxu0 0.0
  %849 = vmatpush.msra.mxu0 0.0
  %850 = vmatpush.msra.mxu0 0.0
  %851 = vmatpush.msra.mxu0 0.0
  %852 = vmatpush.msra.mxu0 0.0
  %853 = vmatpush.msra.mxu0 0.0
  %854 = vmatpush.msra.mxu0 0.0
  %855 = vmatpush.msra.mxu0 0.0
  %856 = vmatpush.msra.mxu0 0.0
  %857 = vmatpush.msra.mxu0 0.0
  %858 = vmatpush.msra.mxu0 0.0
  %859 = vmatpush.msra.mxu0 0.0
  %860 = vmatpush.msra.mxu0 0.0
  %861 = vmatpush.msra.mxu0 0.0
  %862 = vmatpush.msra.mxu0 %v838
  %863 = vmatmul.f32.gmra.mxu0 %v845
  %v864 = vpop.f32.mrf.mxu0
  %v865 = vadd.f32 0.0, %v864
  %866 = vdwg.mxu0
  %867 = vmatpush.msra.mxu0 0.0
  %868 = vmatpush.msra.mxu0 0.0
  %869 = vmatpush.msra.mxu0 0.0
  %870 = vmatpush.msra.mxu0 0.0
  %871 = vmatpush.msra.mxu0 0.0
  %872 = vmatpush.msra.mxu0 0.0
  %873 = vmatpush.msra.mxu0 0.0
  %874 = vmatpush.msra.mxu0 0.0
  %875 = vmatpush.msra.mxu0 0.0
  %876 = vmatpush.msra.mxu0 0.0
  %877 = vmatpush.msra.mxu0 0.0
  %878 = vmatpush.msra.mxu0 0.0
  %879 = vmatpush.msra.mxu0 0.0
  %880 = vmatpush.msra.mxu0 0.0
  %881 = vmatpush.msra.mxu0 0.0
  %882 = vmatpush.msra.mxu0 %v839
  %883 = vmatmul.f32.gmra.mxu0 %v845
  %v884 = vpop.f32.mrf.mxu0
  %v885 = vadd.f32 0.0, %v884
  %886 = vdwg.mxu0
  %887 = vmatpush.msra.mxu0 0.0
  %888 = vmatpush.msra.mxu0 0.0
  %889 = vmatpush.msra.mxu0 0.0
  %890 = vmatpush.msra.mxu0 0.0
  %891 = vmatpush.msra.mxu0 0.0
  %892 = vmatpush.msra.mxu0 0.0
  %893 = vmatpush.msra.mxu0 0.0
  %894 = vmatpush.msra.mxu0 0.0
  %895 = vmatpush.msra.mxu0 0.0
  %896 = vmatpush.msra.mxu0 0.0
  %897 = vmatpush.msra.mxu0 0.0
  %898 = vmatpush.msra.mxu0 0.0
  %899 = vmatpush.msra.mxu0 0.0
  %900 = vmatpush.msra.mxu0 0.0
  %901 = vmatpush.msra.mxu0 0.0
  %902 = vmatpush.msra.mxu0 %v840
  %903 = vmatmul.f32.gmra.mxu0 %v845
  %v904 = vpop.f32.mrf.mxu0
  %v905 = vadd.f32 0.0, %v904
  %906 = vdwg.mxu0
  %907 = vmatpush.msra.mxu0 0.0
  %908 = vmatpush.msra.mxu0 0.0
  %909 = vmatpush.msra.mxu0 0.0
  %910 = vmatpush.msra.mxu0 0.0
  %911 = vmatpush.msra.mxu0 0.0
  %912 = vmatpush.msra.mxu0 0.0
  %913 = vmatpush.msra.mxu0 0.0
  %914 = vmatpush.msra.mxu0 0.0
  %915 = vmatpush.msra.mxu0 0.0
  %916 = vmatpush.msra.mxu0 0.0
  %917 = vmatpush.msra.mxu0 0.0
  %918 = vmatpush.msra.mxu0 0.0
  %919 = vmatpush.msra.mxu0 0.0
  %920 = vmatpush.msra.mxu0 0.0
  %921 = vmatpush.msra.mxu0 0.0
  %922 = vmatpush.msra.mxu0 %v841
  %923 = vmatmul.f32.gmra.mxu0 %v845
  %v924 = vpop.f32.mrf.mxu0
  %v925 = vadd.f32 0.0, %v924
  %926 = vdwg.mxu0
  %v927 = vadd.f32 %v812, %v865
  %v928 = vadd.f32 %v813, %v885
  %v929 = vadd.f32 %v814, %v905
  %v930 = vadd.f32 %v815, %v925
  %931 = vrot.lane.b32.xlu0 %v29, 111
  %v932 = vpop.permute.xlu0 %931
  %933 = vrot.lane.b32.xlu0 %v30, 111
  %v934 = vpop.permute.xlu0 %933
  %935 = vrot.lane.b32.xlu0 %v31, 111
  %v936 = vpop.permute.xlu0 %935
  %937 = vrot.lane.b32.xlu0 %v32, 111
  %v938 = vpop.permute.xlu0 %937
  %vm939 = vcmask 908288
  %v940 = vsel %vm939, %v932, %v934
  %v941 = vsel %vm939, %v934, %v936
  %v942 = vsel %vm939, %v936, %v938
  %v948 = vsel %vm939, %v938, %v932
  %v949 = vperm.slane %v37, 0
  %v950 = vperm.slane %v38, 0
  %v951 = vperm.slane %v39, 0
  %v952 = vperm.slane %v40, 0
  %v953 = vmul.f32 %v940, %v949
  %v954 = vmul.f32 %v941, %v950
  %v955 = vmul.f32 %v942, %v951
  %v956 = vmul.f32 %v948, %v952
  %s957 = scalar_lea.vmem %s1, 64
  %v958 = vld [vmem:[%s957] sm:$0xff]
  %v960 = vsel %vm100, %v958, 0
  %962 = vmatpush.msra.mxu0 0.0
  %963 = vmatpush.msra.mxu0 0.0
  %964 = vmatpush.msra.mxu0 0.0
  %965 = vmatpush.msra.mxu0 0.0
  %966 = vmatpush.msra.mxu0 0.0
  %967 = vmatpush.msra.mxu0 0.0
  %968 = vmatpush.msra.mxu0 0.0
  %969 = vmatpush.msra.mxu0 0.0
  %970 = vmatpush.msra.mxu0 0.0
  %971 = vmatpush.msra.mxu0 0.0
  %972 = vmatpush.msra.mxu0 0.0
  %973 = vmatpush.msra.mxu0 0.0
  %974 = vmatpush.msra.mxu0 0.0
  %975 = vmatpush.msra.mxu0 0.0
  %976 = vmatpush.msra.mxu0 0.0
  %977 = vmatpush.msra.mxu0 %v953
  %978 = vmatmul.f32.gmra.mxu0 %v960
  %v979 = vpop.f32.mrf.mxu0
  %v980 = vadd.f32 0.0, %v979
  %981 = vdwg.mxu0
  %982 = vmatpush.msra.mxu0 0.0
  %983 = vmatpush.msra.mxu0 0.0
  %984 = vmatpush.msra.mxu0 0.0
  %985 = vmatpush.msra.mxu0 0.0
  %986 = vmatpush.msra.mxu0 0.0
  %987 = vmatpush.msra.mxu0 0.0
  %988 = vmatpush.msra.mxu0 0.0
  %989 = vmatpush.msra.mxu0 0.0
  %990 = vmatpush.msra.mxu0 0.0
  %991 = vmatpush.msra.mxu0 0.0
  %992 = vmatpush.msra.mxu0 0.0
  %993 = vmatpush.msra.mxu0 0.0
  %994 = vmatpush.msra.mxu0 0.0
  %995 = vmatpush.msra.mxu0 0.0
  %996 = vmatpush.msra.mxu0 0.0
  %997 = vmatpush.msra.mxu0 %v954
  %998 = vmatmul.f32.gmra.mxu0 %v960
  %v999 = vpop.f32.mrf.mxu0
  %v1000 = vadd.f32 0.0, %v999
  %1001 = vdwg.mxu0
  %1002 = vmatpush.msra.mxu0 0.0
  %1003 = vmatpush.msra.mxu0 0.0
  %1004 = vmatpush.msra.mxu0 0.0
  %1005 = vmatpush.msra.mxu0 0.0
  %1006 = vmatpush.msra.mxu0 0.0
  %1007 = vmatpush.msra.mxu0 0.0
  %1008 = vmatpush.msra.mxu0 0.0
  %1009 = vmatpush.msra.mxu0 0.0
  %1010 = vmatpush.msra.mxu0 0.0
  %1011 = vmatpush.msra.mxu0 0.0
  %1012 = vmatpush.msra.mxu0 0.0
  %1013 = vmatpush.msra.mxu0 0.0
  %1014 = vmatpush.msra.mxu0 0.0
  %1015 = vmatpush.msra.mxu0 0.0
  %1016 = vmatpush.msra.mxu0 0.0
  %1017 = vmatpush.msra.mxu0 %v955
  %1018 = vmatmul.f32.gmra.mxu0 %v960
  %v1019 = vpop.f32.mrf.mxu0
  %v1020 = vadd.f32 0.0, %v1019
  %1021 = vdwg.mxu0
  %1022 = vmatpush.msra.mxu0 0.0
  %1023 = vmatpush.msra.mxu0 0.0
  %1024 = vmatpush.msra.mxu0 0.0
  %1025 = vmatpush.msra.mxu0 0.0
  %1026 = vmatpush.msra.mxu0 0.0
  %1027 = vmatpush.msra.mxu0 0.0
  %1028 = vmatpush.msra.mxu0 0.0
  %1029 = vmatpush.msra.mxu0 0.0
  %1030 = vmatpush.msra.mxu0 0.0
  %1031 = vmatpush.msra.mxu0 0.0
  %1032 = vmatpush.msra.mxu0 0.0
  %1033 = vmatpush.msra.mxu0 0.0
  %1034 = vmatpush.msra.mxu0 0.0
  %1035 = vmatpush.msra.mxu0 0.0
  %1036 = vmatpush.msra.mxu0 0.0
  %1037 = vmatpush.msra.mxu0 %v956
  %1038 = vmatmul.f32.gmra.mxu0 %v960
  %v1039 = vpop.f32.mrf.mxu0
  %v1040 = vadd.f32 0.0, %v1039
  %1041 = vdwg.mxu0
  %v1042 = vadd.f32 %v927, %v980
  %v1043 = vadd.f32 %v928, %v1000
  %v1044 = vadd.f32 %v929, %v1020
  %v1045 = vadd.f32 %v930, %v1040
  %v1046 = vadd.f32 %v1042, %v1043
  %v1047 = vadd.f32 %v1046, %v1044
  %v1048 = vadd.f32 %v1047, %v1045
  %1049 = vadd.xlane.f32.xlu0 %v1048
  %v1050 = vpop.xlane.xlu0 %1049
  %v1051 = vrcp.pop 512.0
  %v1052 = vmul.f32 512.0, %v1051
  %v1053 = vsub.f32 1.0, %v1052
  %v1054 = vmul.f32 %v1051, %v1053
  %v1055 = vadd.f32 %v1051, %v1054
  %vm1056 = vweird.f32 %v1051
  %v1057 = vsel %vm1056, %v1051, %v1055
  %v1058 = vmul.f32 %v1050, %v1057
  %v1059 = vsub.f32 %v1042, %v1058
  %v1060 = vsub.f32 %v1043, %v1058
  %v1061 = vsub.f32 %v1044, %v1058
  %v1062 = vsub.f32 %v1045, %v1058
  %v1063 = vmul.f32 %v1059, %v1059
  %v1064 = vmul.f32 %v1060, %v1060
  %v1065 = vmul.f32 %v1061, %v1061
  %v1066 = vmul.f32 %v1062, %v1062
  %v1067 = vadd.f32 %v1063, %v1064
  %v1068 = vadd.f32 %v1067, %v1065
  %v1069 = vadd.f32 %v1068, %v1066
  %1070 = vadd.xlane.f32.xlu0 %v1069
  %v1071 = vpop.xlane.xlu0 %1070
  %v1072 = vmul.f32 %v1071, %v1057
  %v1073 = vld [vmem:[%s3] sm:$0xff]
  %v1074 = vadd.f32 %v1072, 1e-05
  %v1075 = vrsqrt.pop %v1074
  %v1076 = vmul.f32 %v1075, %v1074
  %v1077 = vmul.f32 %v1076, %v1075
  %v1078 = vmul.f32 0.5, %v1077
  %v1079 = vsub.f32 1.5, %v1078
  %v1080 = vmul.f32 %v1075, %v1079
  %vm1081 = vweird.f32 %v1074
  %vm1082 = vweird.f32 %v1075
  %vm1083 = vmor %vm1081, %vm1082
  %v1084 = vsel %vm1083, %v1075, %v1080
  %v1085 = vmul.f32 %v1073, %v1084
  %1087 = vset.pattern.permute.xlu0 0
  %1088 = vperm.xlu0 %1087, %v1085
  %v1089 = vpop.permute.xlu0 %1088
  %v1091 = vmul.f32 %v1059, %v1089
  %v1092 = vmul.f32 %v1060, %v1089
  %v1093 = vmul.f32 %v1061, %v1089
  %v1094 = vmul.f32 %v1062, %v1089
  %v1095 = vld [vmem:[%s4] sm:$0xff]
  %1097 = vset.pattern.permute.xlu0 0
  %1098 = vperm.xlu0 %1097, %v1095
  %v1099 = vpop.permute.xlu0 %1098
  %v1101 = vadd.f32 %v1091, %v1099
  %v1102 = vadd.f32 %v1092, %v1099
  %v1103 = vadd.f32 %v1093, %v1099
  %v1104 = vadd.f32 %v1094, %v1099
  %v1105 = vmax.f32 %v1101, 0.0
  %v1106 = vmax.f32 %v1102, 0.0
  %v1107 = vmax.f32 %v1103, 0.0
  %v1108 = vmax.f32 %v1104, 0.0
  %1110 = vrot.lane.b32.xlu0 %v1108, 17
  %v1111 = vpop.permute.xlu0 %1110
  %1116 = vrot.lane.b32.xlu0 %v1105, 17
  %v1117 = vpop.permute.xlu0 %1116
  %1118 = vrot.lane.b32.xlu0 %v1106, 17
  %v1119 = vpop.permute.xlu0 %1118
  %1120 = vrot.lane.b32.xlu0 %v1107, 17
  %v1121 = vpop.permute.xlu0 %1120
  %v1122 = vsel %vm54, %v1117, %v1119
  %v1123 = vsel %vm54, %v1119, %v1121
  %v1124 = vsel %vm54, %v1121, %v1111
  %v1129 = vsel %vm54, %v1111, %v1117
  %v1130 = vmul.f32 %v1129, %v63
  %v1131 = vmul.f32 %v1122, %v64
  %v1132 = vmul.f32 %v1123, %v65
  %v1133 = vmul.f32 %v1124, %v66
  %v1134 = vld [vmem:[%s2] sm:$0xff]
  %1135 = vrot.lane.b32.xlu0 %v1108, 16
  %v1136 = vpop.permute.xlu0 %1135
  %1138 = vrot.lane.b32.xlu0 %v1105, 16
  %v1139 = vpop.permute.xlu0 %1138
  %1140 = vrot.lane.b32.xlu0 %v1106, 16
  %v1141 = vpop.permute.xlu0 %1140
  %1142 = vrot.lane.b32.xlu0 %v1107, 16
  %v1143 = vpop.permute.xlu0 %1142
  %v1144 = vsel %vm81, %v1139, %v1141
  %v1145 = vsel %vm81, %v1141, %v1143
  %v1146 = vsel %vm81, %v1143, %v1136
  %v1151 = vsel %vm81, %v1136, %v1139
  %v1152 = vmul.f32 %v1151, %v90
  %v1153 = vmul.f32 %v1144, %v91
  %v1154 = vmul.f32 %v1145, %v92
  %v1155 = vmul.f32 %v1146, %v93
  %s1156 = scalar_lea.vmem %s2, 8
  %v1157 = vld [vmem:[%s1156] sm:$0xff]
  %v1159 = vsel %vm100, %v1157, 0
  %1161 = vmatpush.msra.mxu0 0.0
  %1162 = vmatpush.msra.mxu0 0.0
  %1163 = vmatpush.msra.mxu0 0.0
  %1164 = vmatpush.msra.mxu0 0.0
  %1165 = vmatpush.msra.mxu0 0.0
  %1166 = vmatpush.msra.mxu0 0.0
  %1167 = vmatpush.msra.mxu0 0.0
  %1168 = vmatpush.msra.mxu0 0.0
  %1169 = vmatpush.msra.mxu0 0.0
  %1170 = vmatpush.msra.mxu0 0.0
  %1171 = vmatpush.msra.mxu0 0.0
  %1172 = vmatpush.msra.mxu0 0.0
  %1173 = vmatpush.msra.mxu0 0.0
  %1174 = vmatpush.msra.mxu0 0.0
  %1175 = vmatpush.msra.mxu0 0.0
  %1176 = vmatpush.msra.mxu0 %v1152
  %1177 = vmatmul.f32.gmra.mxu0 %v1159
  %v1178 = vpop.f32.mrf.mxu0
  %v1179 = vadd.f32 0.0, %v1178
  %1180 = vdwg.mxu0
  %1181 = vmatpush.msra.mxu0 0.0
  %1182 = vmatpush.msra.mxu0 0.0
  %1183 = vmatpush.msra.mxu0 0.0
  %1184 = vmatpush.msra.mxu0 0.0
  %1185 = vmatpush.msra.mxu0 0.0
  %1186 = vmatpush.msra.mxu0 0.0
  %1187 = vmatpush.msra.mxu0 0.0
  %1188 = vmatpush.msra.mxu0 0.0
  %1189 = vmatpush.msra.mxu0 0.0
  %1190 = vmatpush.msra.mxu0 0.0
  %1191 = vmatpush.msra.mxu0 0.0
  %1192 = vmatpush.msra.mxu0 0.0
  %1193 = vmatpush.msra.mxu0 0.0
  %1194 = vmatpush.msra.mxu0 0.0
  %1195 = vmatpush.msra.mxu0 0.0
  %1196 = vmatpush.msra.mxu0 %v1153
  %1197 = vmatmul.f32.gmra.mxu0 %v1159
  %v1198 = vpop.f32.mrf.mxu0
  %v1199 = vadd.f32 0.0, %v1198
  %1200 = vdwg.mxu0
  %1201 = vmatpush.msra.mxu0 0.0
  %1202 = vmatpush.msra.mxu0 0.0
  %1203 = vmatpush.msra.mxu0 0.0
  %1204 = vmatpush.msra.mxu0 0.0
  %1205 = vmatpush.msra.mxu0 0.0
  %1206 = vmatpush.msra.mxu0 0.0
  %1207 = vmatpush.msra.mxu0 0.0
  %1208 = vmatpush.msra.mxu0 0.0
  %1209 = vmatpush.msra.mxu0 0.0
  %1210 = vmatpush.msra.mxu0 0.0
  %1211 = vmatpush.msra.mxu0 0.0
  %1212 = vmatpush.msra.mxu0 0.0
  %1213 = vmatpush.msra.mxu0 0.0
  %1214 = vmatpush.msra.mxu0 0.0
  %1215 = vmatpush.msra.mxu0 0.0
  %1216 = vmatpush.msra.mxu0 %v1154
  %1217 = vmatmul.f32.gmra.mxu0 %v1159
  %v1218 = vpop.f32.mrf.mxu0
  %v1219 = vadd.f32 0.0, %v1218
  %1220 = vdwg.mxu0
  %1221 = vmatpush.msra.mxu0 0.0
  %1222 = vmatpush.msra.mxu0 0.0
  %1223 = vmatpush.msra.mxu0 0.0
  %1224 = vmatpush.msra.mxu0 0.0
  %1225 = vmatpush.msra.mxu0 0.0
  %1226 = vmatpush.msra.mxu0 0.0
  %1227 = vmatpush.msra.mxu0 0.0
  %1228 = vmatpush.msra.mxu0 0.0
  %1229 = vmatpush.msra.mxu0 0.0
  %1230 = vmatpush.msra.mxu0 0.0
  %1231 = vmatpush.msra.mxu0 0.0
  %1232 = vmatpush.msra.mxu0 0.0
  %1233 = vmatpush.msra.mxu0 0.0
  %1234 = vmatpush.msra.mxu0 0.0
  %1235 = vmatpush.msra.mxu0 0.0
  %1236 = vmatpush.msra.mxu0 %v1155
  %1237 = vmatmul.f32.gmra.mxu0 %v1159
  %v1238 = vpop.f32.mrf.mxu0
  %v1239 = vadd.f32 0.0, %v1238
  %1240 = vdwg.mxu0
  %v1242 = vsel %vm100, %v1134, 0
  %1244 = vmatpush.msra.mxu0 0.0
  %1245 = vmatpush.msra.mxu0 0.0
  %1246 = vmatpush.msra.mxu0 0.0
  %1247 = vmatpush.msra.mxu0 0.0
  %1248 = vmatpush.msra.mxu0 0.0
  %1249 = vmatpush.msra.mxu0 0.0
  %1250 = vmatpush.msra.mxu0 0.0
  %1251 = vmatpush.msra.mxu0 0.0
  %1252 = vmatpush.msra.mxu0 0.0
  %1253 = vmatpush.msra.mxu0 0.0
  %1254 = vmatpush.msra.mxu0 0.0
  %1255 = vmatpush.msra.mxu0 0.0
  %1256 = vmatpush.msra.mxu0 0.0
  %1257 = vmatpush.msra.mxu0 0.0
  %1258 = vmatpush.msra.mxu0 0.0
  %1259 = vmatpush.msra.mxu0 %v1130
  %1260 = vmatmul.f32.gmra.mxu0 %v1242
  %v1261 = vpop.f32.mrf.mxu0
  %v1262 = vadd.f32 %v1179, %v1261
  %1263 = vdwg.mxu0
  %1264 = vmatpush.msra.mxu0 0.0
  %1265 = vmatpush.msra.mxu0 0.0
  %1266 = vmatpush.msra.mxu0 0.0
  %1267 = vmatpush.msra.mxu0 0.0
  %1268 = vmatpush.msra.mxu0 0.0
  %1269 = vmatpush.msra.mxu0 0.0
  %1270 = vmatpush.msra.mxu0 0.0
  %1271 = vmatpush.msra.mxu0 0.0
  %1272 = vmatpush.msra.mxu0 0.0
  %1273 = vmatpush.msra.mxu0 0.0
  %1274 = vmatpush.msra.mxu0 0.0
  %1275 = vmatpush.msra.mxu0 0.0
  %1276 = vmatpush.msra.mxu0 0.0
  %1277 = vmatpush.msra.mxu0 0.0
  %1278 = vmatpush.msra.mxu0 0.0
  %1279 = vmatpush.msra.mxu0 %v1131
  %1280 = vmatmul.f32.gmra.mxu0 %v1242
  %v1281 = vpop.f32.mrf.mxu0
  %v1282 = vadd.f32 %v1199, %v1281
  %1283 = vdwg.mxu0
  %1284 = vmatpush.msra.mxu0 0.0
  %1285 = vmatpush.msra.mxu0 0.0
  %1286 = vmatpush.msra.mxu0 0.0
  %1287 = vmatpush.msra.mxu0 0.0
  %1288 = vmatpush.msra.mxu0 0.0
  %1289 = vmatpush.msra.mxu0 0.0
  %1290 = vmatpush.msra.mxu0 0.0
  %1291 = vmatpush.msra.mxu0 0.0
  %1292 = vmatpush.msra.mxu0 0.0
  %1293 = vmatpush.msra.mxu0 0.0
  %1294 = vmatpush.msra.mxu0 0.0
  %1295 = vmatpush.msra.mxu0 0.0
  %1296 = vmatpush.msra.mxu0 0.0
  %1297 = vmatpush.msra.mxu0 0.0
  %1298 = vmatpush.msra.mxu0 0.0
  %1299 = vmatpush.msra.mxu0 %v1132
  %1300 = vmatmul.f32.gmra.mxu0 %v1242
  %v1301 = vpop.f32.mrf.mxu0
  %v1302 = vadd.f32 %v1219, %v1301
  %1303 = vdwg.mxu0
  %1304 = vmatpush.msra.mxu0 0.0
  %1305 = vmatpush.msra.mxu0 0.0
  %1306 = vmatpush.msra.mxu0 0.0
  %1307 = vmatpush.msra.mxu0 0.0
  %1308 = vmatpush.msra.mxu0 0.0
  %1309 = vmatpush.msra.mxu0 0.0
  %1310 = vmatpush.msra.mxu0 0.0
  %1311 = vmatpush.msra.mxu0 0.0
  %1312 = vmatpush.msra.mxu0 0.0
  %1313 = vmatpush.msra.mxu0 0.0
  %1314 = vmatpush.msra.mxu0 0.0
  %1315 = vmatpush.msra.mxu0 0.0
  %1316 = vmatpush.msra.mxu0 0.0
  %1317 = vmatpush.msra.mxu0 0.0
  %1318 = vmatpush.msra.mxu0 0.0
  %1319 = vmatpush.msra.mxu0 %v1133
  %1320 = vmatmul.f32.gmra.mxu0 %v1242
  %v1321 = vpop.f32.mrf.mxu0
  %v1322 = vadd.f32 %v1239, %v1321
  %1323 = vdwg.mxu0
  %1324 = vrot.lane.b32.xlu0 %v1108, 15
  %v1325 = vpop.permute.xlu0 %1324
  %1327 = vrot.lane.b32.xlu0 %v1105, 15
  %v1328 = vpop.permute.xlu0 %1327
  %1329 = vrot.lane.b32.xlu0 %v1106, 15
  %v1330 = vpop.permute.xlu0 %1329
  %1331 = vrot.lane.b32.xlu0 %v1107, 15
  %v1332 = vpop.permute.xlu0 %1331
  %v1333 = vsel %vm276, %v1328, %v1330
  %v1334 = vsel %vm276, %v1330, %v1332
  %v1335 = vsel %vm276, %v1332, %v1325
  %v1340 = vsel %vm276, %v1325, %v1328
  %v1341 = vmul.f32 %v1340, %v285
  %v1342 = vmul.f32 %v1333, %v286
  %v1343 = vmul.f32 %v1334, %v287
  %v1344 = vmul.f32 %v1335, %v288
  %s1345 = scalar_lea.vmem %s2, 16
  %v1346 = vld [vmem:[%s1345] sm:$0xff]
  %v1348 = vsel %vm100, %v1346, 0
  %1350 = vmatpush.msra.mxu0 0.0
  %1351 = vmatpush.msra.mxu0 0.0
  %1352 = vmatpush.msra.mxu0 0.0
  %1353 = vmatpush.msra.mxu0 0.0
  %1354 = vmatpush.msra.mxu0 0.0
  %1355 = vmatpush.msra.mxu0 0.0
  %1356 = vmatpush.msra.mxu0 0.0
  %1357 = vmatpush.msra.mxu0 0.0
  %1358 = vmatpush.msra.mxu0 0.0
  %1359 = vmatpush.msra.mxu0 0.0
  %1360 = vmatpush.msra.mxu0 0.0
  %1361 = vmatpush.msra.mxu0 0.0
  %1362 = vmatpush.msra.mxu0 0.0
  %1363 = vmatpush.msra.mxu0 0.0
  %1364 = vmatpush.msra.mxu0 0.0
  %1365 = vmatpush.msra.mxu0 %v1341
  %1366 = vmatmul.f32.gmra.mxu0 %v1348
  %v1367 = vpop.f32.mrf.mxu0
  %v1368 = vadd.f32 0.0, %v1367
  %1369 = vdwg.mxu0
  %1370 = vmatpush.msra.mxu0 0.0
  %1371 = vmatpush.msra.mxu0 0.0
  %1372 = vmatpush.msra.mxu0 0.0
  %1373 = vmatpush.msra.mxu0 0.0
  %1374 = vmatpush.msra.mxu0 0.0
  %1375 = vmatpush.msra.mxu0 0.0
  %1376 = vmatpush.msra.mxu0 0.0
  %1377 = vmatpush.msra.mxu0 0.0
  %1378 = vmatpush.msra.mxu0 0.0
  %1379 = vmatpush.msra.mxu0 0.0
  %1380 = vmatpush.msra.mxu0 0.0
  %1381 = vmatpush.msra.mxu0 0.0
  %1382 = vmatpush.msra.mxu0 0.0
  %1383 = vmatpush.msra.mxu0 0.0
  %1384 = vmatpush.msra.mxu0 0.0
  %1385 = vmatpush.msra.mxu0 %v1342
  %1386 = vmatmul.f32.gmra.mxu0 %v1348
  %v1387 = vpop.f32.mrf.mxu0
  %v1388 = vadd.f32 0.0, %v1387
  %1389 = vdwg.mxu0
  %1390 = vmatpush.msra.mxu0 0.0
  %1391 = vmatpush.msra.mxu0 0.0
  %1392 = vmatpush.msra.mxu0 0.0
  %1393 = vmatpush.msra.mxu0 0.0
  %1394 = vmatpush.msra.mxu0 0.0
  %1395 = vmatpush.msra.mxu0 0.0
  %1396 = vmatpush.msra.mxu0 0.0
  %1397 = vmatpush.msra.mxu0 0.0
  %1398 = vmatpush.msra.mxu0 0.0
  %1399 = vmatpush.msra.mxu0 0.0
  %1400 = vmatpush.msra.mxu0 0.0
  %1401 = vmatpush.msra.mxu0 0.0
  %1402 = vmatpush.msra.mxu0 0.0
  %1403 = vmatpush.msra.mxu0 0.0
  %1404 = vmatpush.msra.mxu0 0.0
  %1405 = vmatpush.msra.mxu0 %v1343
  %1406 = vmatmul.f32.gmra.mxu0 %v1348
  %v1407 = vpop.f32.mrf.mxu0
  %v1408 = vadd.f32 0.0, %v1407
  %1409 = vdwg.mxu0
  %1410 = vmatpush.msra.mxu0 0.0
  %1411 = vmatpush.msra.mxu0 0.0
  %1412 = vmatpush.msra.mxu0 0.0
  %1413 = vmatpush.msra.mxu0 0.0
  %1414 = vmatpush.msra.mxu0 0.0
  %1415 = vmatpush.msra.mxu0 0.0
  %1416 = vmatpush.msra.mxu0 0.0
  %1417 = vmatpush.msra.mxu0 0.0
  %1418 = vmatpush.msra.mxu0 0.0
  %1419 = vmatpush.msra.mxu0 0.0
  %1420 = vmatpush.msra.mxu0 0.0
  %1421 = vmatpush.msra.mxu0 0.0
  %1422 = vmatpush.msra.mxu0 0.0
  %1423 = vmatpush.msra.mxu0 0.0
  %1424 = vmatpush.msra.mxu0 0.0
  %1425 = vmatpush.msra.mxu0 %v1344
  %1426 = vmatmul.f32.gmra.mxu0 %v1348
  %v1427 = vpop.f32.mrf.mxu0
  %v1428 = vadd.f32 0.0, %v1427
  %1429 = vdwg.mxu0
  %v1430 = vadd.f32 %v1262, %v1368
  %v1431 = vadd.f32 %v1282, %v1388
  %v1432 = vadd.f32 %v1302, %v1408
  %v1433 = vadd.f32 %v1322, %v1428
  %1434 = vrot.lane.b32.xlu0 %v1108, 1
  %v1435 = vpop.permute.xlu0 %1434
  %1437 = vrot.lane.b32.xlu0 %v1105, 1
  %v1438 = vpop.permute.xlu0 %1437
  %1439 = vrot.lane.b32.xlu0 %v1106, 1
  %v1440 = vpop.permute.xlu0 %1439
  %1441 = vrot.lane.b32.xlu0 %v1107, 1
  %v1442 = vpop.permute.xlu0 %1441
  %v1443 = vsel %vm391, %v1438, %v1440
  %v1444 = vsel %vm391, %v1440, %v1442
  %v1445 = vsel %vm391, %v1442, %v1435
  %v1450 = vsel %vm391, %v1435, %v1438
  %v1451 = vmul.f32 %v1450, %v400
  %v1452 = vmul.f32 %v1443, %v401
  %v1453 = vmul.f32 %v1444, %v402
  %v1454 = vmul.f32 %v1445, %v403
  %s1455 = scalar_lea.vmem %s2, 24
  %v1456 = vld [vmem:[%s1455] sm:$0xff]
  %v1458 = vsel %vm100, %v1456, 0
  %1460 = vmatpush.msra.mxu0 0.0
  %1461 = vmatpush.msra.mxu0 0.0
  %1462 = vmatpush.msra.mxu0 0.0
  %1463 = vmatpush.msra.mxu0 0.0
  %1464 = vmatpush.msra.mxu0 0.0
  %1465 = vmatpush.msra.mxu0 0.0
  %1466 = vmatpush.msra.mxu0 0.0
  %1467 = vmatpush.msra.mxu0 0.0
  %1468 = vmatpush.msra.mxu0 0.0
  %1469 = vmatpush.msra.mxu0 0.0
  %1470 = vmatpush.msra.mxu0 0.0
  %1471 = vmatpush.msra.mxu0 0.0
  %1472 = vmatpush.msra.mxu0 0.0
  %1473 = vmatpush.msra.mxu0 0.0
  %1474 = vmatpush.msra.mxu0 0.0
  %1475 = vmatpush.msra.mxu0 %v1451
  %1476 = vmatmul.f32.gmra.mxu0 %v1458
  %v1477 = vpop.f32.mrf.mxu0
  %v1478 = vadd.f32 0.0, %v1477
  %1479 = vdwg.mxu0
  %1480 = vmatpush.msra.mxu0 0.0
  %1481 = vmatpush.msra.mxu0 0.0
  %1482 = vmatpush.msra.mxu0 0.0
  %1483 = vmatpush.msra.mxu0 0.0
  %1484 = vmatpush.msra.mxu0 0.0
  %1485 = vmatpush.msra.mxu0 0.0
  %1486 = vmatpush.msra.mxu0 0.0
  %1487 = vmatpush.msra.mxu0 0.0
  %1488 = vmatpush.msra.mxu0 0.0
  %1489 = vmatpush.msra.mxu0 0.0
  %1490 = vmatpush.msra.mxu0 0.0
  %1491 = vmatpush.msra.mxu0 0.0
  %1492 = vmatpush.msra.mxu0 0.0
  %1493 = vmatpush.msra.mxu0 0.0
  %1494 = vmatpush.msra.mxu0 0.0
  %1495 = vmatpush.msra.mxu0 %v1452
  %1496 = vmatmul.f32.gmra.mxu0 %v1458
  %v1497 = vpop.f32.mrf.mxu0
  %v1498 = vadd.f32 0.0, %v1497
  %1499 = vdwg.mxu0
  %1500 = vmatpush.msra.mxu0 0.0
  %1501 = vmatpush.msra.mxu0 0.0
  %1502 = vmatpush.msra.mxu0 0.0
  %1503 = vmatpush.msra.mxu0 0.0
  %1504 = vmatpush.msra.mxu0 0.0
  %1505 = vmatpush.msra.mxu0 0.0
  %1506 = vmatpush.msra.mxu0 0.0
  %1507 = vmatpush.msra.mxu0 0.0
  %1508 = vmatpush.msra.mxu0 0.0
  %1509 = vmatpush.msra.mxu0 0.0
  %1510 = vmatpush.msra.mxu0 0.0
  %1511 = vmatpush.msra.mxu0 0.0
  %1512 = vmatpush.msra.mxu0 0.0
  %1513 = vmatpush.msra.mxu0 0.0
  %1514 = vmatpush.msra.mxu0 0.0
  %1515 = vmatpush.msra.mxu0 %v1453
  %1516 = vmatmul.f32.gmra.mxu0 %v1458
  %v1517 = vpop.f32.mrf.mxu0
  %v1518 = vadd.f32 0.0, %v1517
  %1519 = vdwg.mxu0
  %1520 = vmatpush.msra.mxu0 0.0
  %1521 = vmatpush.msra.mxu0 0.0
  %1522 = vmatpush.msra.mxu0 0.0
  %1523 = vmatpush.msra.mxu0 0.0
  %1524 = vmatpush.msra.mxu0 0.0
  %1525 = vmatpush.msra.mxu0 0.0
  %1526 = vmatpush.msra.mxu0 0.0
  %1527 = vmatpush.msra.mxu0 0.0
  %1528 = vmatpush.msra.mxu0 0.0
  %1529 = vmatpush.msra.mxu0 0.0
  %1530 = vmatpush.msra.mxu0 0.0
  %1531 = vmatpush.msra.mxu0 0.0
  %1532 = vmatpush.msra.mxu0 0.0
  %1533 = vmatpush.msra.mxu0 0.0
  %1534 = vmatpush.msra.mxu0 0.0
  %1535 = vmatpush.msra.mxu0 %v1454
  %1536 = vmatmul.f32.gmra.mxu0 %v1458
  %v1537 = vpop.f32.mrf.mxu0
  %v1538 = vadd.f32 0.0, %v1537
  %1539 = vdwg.mxu0
  %v1540 = vadd.f32 %v1430, %v1478
  %v1541 = vadd.f32 %v1431, %v1498
  %v1542 = vadd.f32 %v1432, %v1518
  %v1543 = vadd.f32 %v1433, %v1538
  %s1544 = scalar_lea.vmem %s2, 32
  %v1545 = vld [vmem:[%s1544] sm:$0xff]
  %v1547 = vsel %vm100, %v1545, 0
  %1549 = vmatpush.msra.mxu0 0.0
  %1550 = vmatpush.msra.mxu0 0.0
  %1551 = vmatpush.msra.mxu0 0.0
  %1552 = vmatpush.msra.mxu0 0.0
  %1553 = vmatpush.msra.mxu0 0.0
  %1554 = vmatpush.msra.mxu0 0.0
  %1555 = vmatpush.msra.mxu0 0.0
  %1556 = vmatpush.msra.mxu0 0.0
  %1557 = vmatpush.msra.mxu0 0.0
  %1558 = vmatpush.msra.mxu0 0.0
  %1559 = vmatpush.msra.mxu0 0.0
  %1560 = vmatpush.msra.mxu0 0.0
  %1561 = vmatpush.msra.mxu0 0.0
  %1562 = vmatpush.msra.mxu0 0.0
  %1563 = vmatpush.msra.mxu0 0.0
  %1564 = vmatpush.msra.mxu0 %v1105
  %1565 = vmatmul.f32.gmra.mxu0 %v1547
  %v1566 = vpop.f32.mrf.mxu0
  %v1567 = vadd.f32 0.0, %v1566
  %1568 = vdwg.mxu0
  %1569 = vmatpush.msra.mxu0 0.0
  %1570 = vmatpush.msra.mxu0 0.0
  %1571 = vmatpush.msra.mxu0 0.0
  %1572 = vmatpush.msra.mxu0 0.0
  %1573 = vmatpush.msra.mxu0 0.0
  %1574 = vmatpush.msra.mxu0 0.0
  %1575 = vmatpush.msra.mxu0 0.0
  %1576 = vmatpush.msra.mxu0 0.0
  %1577 = vmatpush.msra.mxu0 0.0
  %1578 = vmatpush.msra.mxu0 0.0
  %1579 = vmatpush.msra.mxu0 0.0
  %1580 = vmatpush.msra.mxu0 0.0
  %1581 = vmatpush.msra.mxu0 0.0
  %1582 = vmatpush.msra.mxu0 0.0
  %1583 = vmatpush.msra.mxu0 0.0
  %1584 = vmatpush.msra.mxu0 %v1106
  %1585 = vmatmul.f32.gmra.mxu0 %v1547
  %v1586 = vpop.f32.mrf.mxu0
  %v1587 = vadd.f32 0.0, %v1586
  %1588 = vdwg.mxu0
  %1589 = vmatpush.msra.mxu0 0.0
  %1590 = vmatpush.msra.mxu0 0.0
  %1591 = vmatpush.msra.mxu0 0.0
  %1592 = vmatpush.msra.mxu0 0.0
  %1593 = vmatpush.msra.mxu0 0.0
  %1594 = vmatpush.msra.mxu0 0.0
  %1595 = vmatpush.msra.mxu0 0.0
  %1596 = vmatpush.msra.mxu0 0.0
  %1597 = vmatpush.msra.mxu0 0.0
  %1598 = vmatpush.msra.mxu0 0.0
  %1599 = vmatpush.msra.mxu0 0.0
  %1600 = vmatpush.msra.mxu0 0.0
  %1601 = vmatpush.msra.mxu0 0.0
  %1602 = vmatpush.msra.mxu0 0.0
  %1603 = vmatpush.msra.mxu0 0.0
  %1604 = vmatpush.msra.mxu0 %v1107
  %1605 = vmatmul.f32.gmra.mxu0 %v1547
  %v1606 = vpop.f32.mrf.mxu0
  %v1607 = vadd.f32 0.0, %v1606
  %1608 = vdwg.mxu0
  %1609 = vmatpush.msra.mxu0 0.0
  %1610 = vmatpush.msra.mxu0 0.0
  %1611 = vmatpush.msra.mxu0 0.0
  %1612 = vmatpush.msra.mxu0 0.0
  %1613 = vmatpush.msra.mxu0 0.0
  %1614 = vmatpush.msra.mxu0 0.0
  %1615 = vmatpush.msra.mxu0 0.0
  %1616 = vmatpush.msra.mxu0 0.0
  %1617 = vmatpush.msra.mxu0 0.0
  %1618 = vmatpush.msra.mxu0 0.0
  %1619 = vmatpush.msra.mxu0 0.0
  %1620 = vmatpush.msra.mxu0 0.0
  %1621 = vmatpush.msra.mxu0 0.0
  %1622 = vmatpush.msra.mxu0 0.0
  %1623 = vmatpush.msra.mxu0 0.0
  %1624 = vmatpush.msra.mxu0 %v1108
  %1625 = vmatmul.f32.gmra.mxu0 %v1547
  %v1626 = vpop.f32.mrf.mxu0
  %v1627 = vadd.f32 0.0, %v1626
  %1628 = vdwg.mxu0
  %v1629 = vadd.f32 %v1540, %v1567
  %v1630 = vadd.f32 %v1541, %v1587
  %v1631 = vadd.f32 %v1542, %v1607
  %v1632 = vadd.f32 %v1543, %v1627
  %1633 = vrot.lane.b32.xlu0 %v1105, 127
  %v1634 = vpop.permute.xlu0 %1633
  %1635 = vrot.lane.b32.xlu0 %v1106, 127
  %v1636 = vpop.permute.xlu0 %1635
  %1637 = vrot.lane.b32.xlu0 %v1107, 127
  %v1638 = vpop.permute.xlu0 %1637
  %1639 = vrot.lane.b32.xlu0 %v1108, 127
  %v1640 = vpop.permute.xlu0 %1639
  %v1641 = vsel %vm594, %v1634, %v1636
  %v1642 = vsel %vm594, %v1636, %v1638
  %v1643 = vsel %vm594, %v1638, %v1640
  %v1649 = vsel %vm594, %v1640, %v1634
  %v1650 = vmul.f32 %v1641, %v604
  %v1651 = vmul.f32 %v1642, %v605
  %v1652 = vmul.f32 %v1643, %v606
  %v1653 = vmul.f32 %v1649, %v607
  %s1654 = scalar_lea.vmem %s2, 40
  %v1655 = vld [vmem:[%s1654] sm:$0xff]
  %v1657 = vsel %vm100, %v1655, 0
  %1659 = vmatpush.msra.mxu0 0.0
  %1660 = vmatpush.msra.mxu0 0.0
  %1661 = vmatpush.msra.mxu0 0.0
  %1662 = vmatpush.msra.mxu0 0.0
  %1663 = vmatpush.msra.mxu0 0.0
  %1664 = vmatpush.msra.mxu0 0.0
  %1665 = vmatpush.msra.mxu0 0.0
  %1666 = vmatpush.msra.mxu0 0.0
  %1667 = vmatpush.msra.mxu0 0.0
  %1668 = vmatpush.msra.mxu0 0.0
  %1669 = vmatpush.msra.mxu0 0.0
  %1670 = vmatpush.msra.mxu0 0.0
  %1671 = vmatpush.msra.mxu0 0.0
  %1672 = vmatpush.msra.mxu0 0.0
  %1673 = vmatpush.msra.mxu0 0.0
  %1674 = vmatpush.msra.mxu0 %v1650
  %1675 = vmatmul.f32.gmra.mxu0 %v1657
  %v1676 = vpop.f32.mrf.mxu0
  %v1677 = vadd.f32 0.0, %v1676
  %1678 = vdwg.mxu0
  %1679 = vmatpush.msra.mxu0 0.0
  %1680 = vmatpush.msra.mxu0 0.0
  %1681 = vmatpush.msra.mxu0 0.0
  %1682 = vmatpush.msra.mxu0 0.0
  %1683 = vmatpush.msra.mxu0 0.0
  %1684 = vmatpush.msra.mxu0 0.0
  %1685 = vmatpush.msra.mxu0 0.0
  %1686 = vmatpush.msra.mxu0 0.0
  %1687 = vmatpush.msra.mxu0 0.0
  %1688 = vmatpush.msra.mxu0 0.0
  %1689 = vmatpush.msra.mxu0 0.0
  %1690 = vmatpush.msra.mxu0 0.0
  %1691 = vmatpush.msra.mxu0 0.0
  %1692 = vmatpush.msra.mxu0 0.0
  %1693 = vmatpush.msra.mxu0 0.0
  %1694 = vmatpush.msra.mxu0 %v1651
  %1695 = vmatmul.f32.gmra.mxu0 %v1657
  %v1696 = vpop.f32.mrf.mxu0
  %v1697 = vadd.f32 0.0, %v1696
  %1698 = vdwg.mxu0
  %1699 = vmatpush.msra.mxu0 0.0
  %1700 = vmatpush.msra.mxu0 0.0
  %1701 = vmatpush.msra.mxu0 0.0
  %1702 = vmatpush.msra.mxu0 0.0
  %1703 = vmatpush.msra.mxu0 0.0
  %1704 = vmatpush.msra.mxu0 0.0
  %1705 = vmatpush.msra.mxu0 0.0
  %1706 = vmatpush.msra.mxu0 0.0
  %1707 = vmatpush.msra.mxu0 0.0
  %1708 = vmatpush.msra.mxu0 0.0
  %1709 = vmatpush.msra.mxu0 0.0
  %1710 = vmatpush.msra.mxu0 0.0
  %1711 = vmatpush.msra.mxu0 0.0
  %1712 = vmatpush.msra.mxu0 0.0
  %1713 = vmatpush.msra.mxu0 0.0
  %1714 = vmatpush.msra.mxu0 %v1652
  %1715 = vmatmul.f32.gmra.mxu0 %v1657
  %v1716 = vpop.f32.mrf.mxu0
  %v1717 = vadd.f32 0.0, %v1716
  %1718 = vdwg.mxu0
  %1719 = vmatpush.msra.mxu0 0.0
  %1720 = vmatpush.msra.mxu0 0.0
  %1721 = vmatpush.msra.mxu0 0.0
  %1722 = vmatpush.msra.mxu0 0.0
  %1723 = vmatpush.msra.mxu0 0.0
  %1724 = vmatpush.msra.mxu0 0.0
  %1725 = vmatpush.msra.mxu0 0.0
  %1726 = vmatpush.msra.mxu0 0.0
  %1727 = vmatpush.msra.mxu0 0.0
  %1728 = vmatpush.msra.mxu0 0.0
  %1729 = vmatpush.msra.mxu0 0.0
  %1730 = vmatpush.msra.mxu0 0.0
  %1731 = vmatpush.msra.mxu0 0.0
  %1732 = vmatpush.msra.mxu0 0.0
  %1733 = vmatpush.msra.mxu0 0.0
  %1734 = vmatpush.msra.mxu0 %v1653
  %1735 = vmatmul.f32.gmra.mxu0 %v1657
  %v1736 = vpop.f32.mrf.mxu0
  %v1737 = vadd.f32 0.0, %v1736
  %1738 = vdwg.mxu0
  %v1739 = vadd.f32 %v1629, %v1677
  %v1740 = vadd.f32 %v1630, %v1697
  %v1741 = vadd.f32 %v1631, %v1717
  %v1742 = vadd.f32 %v1632, %v1737
  %1743 = vrot.lane.b32.xlu0 %v1105, 113
  %v1744 = vpop.permute.xlu0 %1743
  %1745 = vrot.lane.b32.xlu0 %v1106, 113
  %v1746 = vpop.permute.xlu0 %1745
  %1747 = vrot.lane.b32.xlu0 %v1107, 113
  %v1748 = vpop.permute.xlu0 %1747
  %1749 = vrot.lane.b32.xlu0 %v1108, 113
  %v1750 = vpop.permute.xlu0 %1749
  %v1751 = vsel %vm709, %v1744, %v1746
  %v1752 = vsel %vm709, %v1746, %v1748
  %v1753 = vsel %vm709, %v1748, %v1750
  %v1759 = vsel %vm709, %v1750, %v1744
  %v1760 = vmul.f32 %v1751, %v719
  %v1761 = vmul.f32 %v1752, %v720
  %v1762 = vmul.f32 %v1753, %v721
  %v1763 = vmul.f32 %v1759, %v722
  %s1764 = scalar_lea.vmem %s2, 48
  %v1765 = vld [vmem:[%s1764] sm:$0xff]
  %v1767 = vsel %vm100, %v1765, 0
  %1769 = vmatpush.msra.mxu0 0.0
  %1770 = vmatpush.msra.mxu0 0.0
  %1771 = vmatpush.msra.mxu0 0.0
  %1772 = vmatpush.msra.mxu0 0.0
  %1773 = vmatpush.msra.mxu0 0.0
  %1774 = vmatpush.msra.mxu0 0.0
  %1775 = vmatpush.msra.mxu0 0.0
  %1776 = vmatpush.msra.mxu0 0.0
  %1777 = vmatpush.msra.mxu0 0.0
  %1778 = vmatpush.msra.mxu0 0.0
  %1779 = vmatpush.msra.mxu0 0.0
  %1780 = vmatpush.msra.mxu0 0.0
  %1781 = vmatpush.msra.mxu0 0.0
  %1782 = vmatpush.msra.mxu0 0.0
  %1783 = vmatpush.msra.mxu0 0.0
  %1784 = vmatpush.msra.mxu0 %v1760
  %1785 = vmatmul.f32.gmra.mxu0 %v1767
  %v1786 = vpop.f32.mrf.mxu0
  %v1787 = vadd.f32 0.0, %v1786
  %1788 = vdwg.mxu0
  %1789 = vmatpush.msra.mxu0 0.0
  %1790 = vmatpush.msra.mxu0 0.0
  %1791 = vmatpush.msra.mxu0 0.0
  %1792 = vmatpush.msra.mxu0 0.0
  %1793 = vmatpush.msra.mxu0 0.0
  %1794 = vmatpush.msra.mxu0 0.0
  %1795 = vmatpush.msra.mxu0 0.0
  %1796 = vmatpush.msra.mxu0 0.0
  %1797 = vmatpush.msra.mxu0 0.0
  %1798 = vmatpush.msra.mxu0 0.0
  %1799 = vmatpush.msra.mxu0 0.0
  %1800 = vmatpush.msra.mxu0 0.0
  %1801 = vmatpush.msra.mxu0 0.0
  %1802 = vmatpush.msra.mxu0 0.0
  %1803 = vmatpush.msra.mxu0 0.0
  %1804 = vmatpush.msra.mxu0 %v1761
  %1805 = vmatmul.f32.gmra.mxu0 %v1767
  %v1806 = vpop.f32.mrf.mxu0
  %v1807 = vadd.f32 0.0, %v1806
  %1808 = vdwg.mxu0
  %1809 = vmatpush.msra.mxu0 0.0
  %1810 = vmatpush.msra.mxu0 0.0
  %1811 = vmatpush.msra.mxu0 0.0
  %1812 = vmatpush.msra.mxu0 0.0
  %1813 = vmatpush.msra.mxu0 0.0
  %1814 = vmatpush.msra.mxu0 0.0
  %1815 = vmatpush.msra.mxu0 0.0
  %1816 = vmatpush.msra.mxu0 0.0
  %1817 = vmatpush.msra.mxu0 0.0
  %1818 = vmatpush.msra.mxu0 0.0
  %1819 = vmatpush.msra.mxu0 0.0
  %1820 = vmatpush.msra.mxu0 0.0
  %1821 = vmatpush.msra.mxu0 0.0
  %1822 = vmatpush.msra.mxu0 0.0
  %1823 = vmatpush.msra.mxu0 0.0
  %1824 = vmatpush.msra.mxu0 %v1762
  %1825 = vmatmul.f32.gmra.mxu0 %v1767
  %v1826 = vpop.f32.mrf.mxu0
  %v1827 = vadd.f32 0.0, %v1826
  %1828 = vdwg.mxu0
  %1829 = vmatpush.msra.mxu0 0.0
  %1830 = vmatpush.msra.mxu0 0.0
  %1831 = vmatpush.msra.mxu0 0.0
  %1832 = vmatpush.msra.mxu0 0.0
  %1833 = vmatpush.msra.mxu0 0.0
  %1834 = vmatpush.msra.mxu0 0.0
  %1835 = vmatpush.msra.mxu0 0.0
  %1836 = vmatpush.msra.mxu0 0.0
  %1837 = vmatpush.msra.mxu0 0.0
  %1838 = vmatpush.msra.mxu0 0.0
  %1839 = vmatpush.msra.mxu0 0.0
  %1840 = vmatpush.msra.mxu0 0.0
  %1841 = vmatpush.msra.mxu0 0.0
  %1842 = vmatpush.msra.mxu0 0.0
  %1843 = vmatpush.msra.mxu0 0.0
  %1844 = vmatpush.msra.mxu0 %v1763
  %1845 = vmatmul.f32.gmra.mxu0 %v1767
  %v1846 = vpop.f32.mrf.mxu0
  %v1847 = vadd.f32 0.0, %v1846
  %1848 = vdwg.mxu0
  %v1849 = vadd.f32 %v1739, %v1787
  %v1850 = vadd.f32 %v1740, %v1807
  %v1851 = vadd.f32 %v1741, %v1827
  %v1852 = vadd.f32 %v1742, %v1847
  %1853 = vrot.lane.b32.xlu0 %v1105, 112
  %v1854 = vpop.permute.xlu0 %1853
  %1855 = vrot.lane.b32.xlu0 %v1106, 112
  %v1856 = vpop.permute.xlu0 %1855
  %1857 = vrot.lane.b32.xlu0 %v1107, 112
  %v1858 = vpop.permute.xlu0 %1857
  %1859 = vrot.lane.b32.xlu0 %v1108, 112
  %v1860 = vpop.permute.xlu0 %1859
  %v1861 = vsel %vm824, %v1854, %v1856
  %v1862 = vsel %vm824, %v1856, %v1858
  %v1863 = vsel %vm824, %v1858, %v1860
  %v1869 = vsel %vm824, %v1860, %v1854
  %v1870 = vmul.f32 %v1861, %v834
  %v1871 = vmul.f32 %v1862, %v835
  %v1872 = vmul.f32 %v1863, %v836
  %v1873 = vmul.f32 %v1869, %v837
  %s1874 = scalar_lea.vmem %s2, 56
  %v1875 = vld [vmem:[%s1874] sm:$0xff]
  %v1877 = vsel %vm100, %v1875, 0
  %1879 = vmatpush.msra.mxu0 0.0
  %1880 = vmatpush.msra.mxu0 0.0
  %1881 = vmatpush.msra.mxu0 0.0
  %1882 = vmatpush.msra.mxu0 0.0
  %1883 = vmatpush.msra.mxu0 0.0
  %1884 = vmatpush.msra.mxu0 0.0
  %1885 = vmatpush.msra.mxu0 0.0
  %1886 = vmatpush.msra.mxu0 0.0
  %1887 = vmatpush.msra.mxu0 0.0
  %1888 = vmatpush.msra.mxu0 0.0
  %1889 = vmatpush.msra.mxu0 0.0
  %1890 = vmatpush.msra.mxu0 0.0
  %1891 = vmatpush.msra.mxu0 0.0
  %1892 = vmatpush.msra.mxu0 0.0
  %1893 = vmatpush.msra.mxu0 0.0
  %1894 = vmatpush.msra.mxu0 %v1870
  %1895 = vmatmul.f32.gmra.mxu0 %v1877
  %v1896 = vpop.f32.mrf.mxu0
  %v1897 = vadd.f32 0.0, %v1896
  %1898 = vdwg.mxu0
  %1899 = vmatpush.msra.mxu0 0.0
  %1900 = vmatpush.msra.mxu0 0.0
  %1901 = vmatpush.msra.mxu0 0.0
  %1902 = vmatpush.msra.mxu0 0.0
  %1903 = vmatpush.msra.mxu0 0.0
  %1904 = vmatpush.msra.mxu0 0.0
  %1905 = vmatpush.msra.mxu0 0.0
  %1906 = vmatpush.msra.mxu0 0.0
  %1907 = vmatpush.msra.mxu0 0.0
  %1908 = vmatpush.msra.mxu0 0.0
  %1909 = vmatpush.msra.mxu0 0.0
  %1910 = vmatpush.msra.mxu0 0.0
  %1911 = vmatpush.msra.mxu0 0.0
  %1912 = vmatpush.msra.mxu0 0.0
  %1913 = vmatpush.msra.mxu0 0.0
  %1914 = vmatpush.msra.mxu0 %v1871
  %1915 = vmatmul.f32.gmra.mxu0 %v1877
  %v1916 = vpop.f32.mrf.mxu0
  %v1917 = vadd.f32 0.0, %v1916
  %1918 = vdwg.mxu0
  %1919 = vmatpush.msra.mxu0 0.0
  %1920 = vmatpush.msra.mxu0 0.0
  %1921 = vmatpush.msra.mxu0 0.0
  %1922 = vmatpush.msra.mxu0 0.0
  %1923 = vmatpush.msra.mxu0 0.0
  %1924 = vmatpush.msra.mxu0 0.0
  %1925 = vmatpush.msra.mxu0 0.0
  %1926 = vmatpush.msra.mxu0 0.0
  %1927 = vmatpush.msra.mxu0 0.0
  %1928 = vmatpush.msra.mxu0 0.0
  %1929 = vmatpush.msra.mxu0 0.0
  %1930 = vmatpush.msra.mxu0 0.0
  %1931 = vmatpush.msra.mxu0 0.0
  %1932 = vmatpush.msra.mxu0 0.0
  %1933 = vmatpush.msra.mxu0 0.0
  %1934 = vmatpush.msra.mxu0 %v1872
  %1935 = vmatmul.f32.gmra.mxu0 %v1877
  %v1936 = vpop.f32.mrf.mxu0
  %v1937 = vadd.f32 0.0, %v1936
  %1938 = vdwg.mxu0
  %1939 = vmatpush.msra.mxu0 0.0
  %1940 = vmatpush.msra.mxu0 0.0
  %1941 = vmatpush.msra.mxu0 0.0
  %1942 = vmatpush.msra.mxu0 0.0
  %1943 = vmatpush.msra.mxu0 0.0
  %1944 = vmatpush.msra.mxu0 0.0
  %1945 = vmatpush.msra.mxu0 0.0
  %1946 = vmatpush.msra.mxu0 0.0
  %1947 = vmatpush.msra.mxu0 0.0
  %1948 = vmatpush.msra.mxu0 0.0
  %1949 = vmatpush.msra.mxu0 0.0
  %1950 = vmatpush.msra.mxu0 0.0
  %1951 = vmatpush.msra.mxu0 0.0
  %1952 = vmatpush.msra.mxu0 0.0
  %1953 = vmatpush.msra.mxu0 0.0
  %1954 = vmatpush.msra.mxu0 %v1873
  %1955 = vmatmul.f32.gmra.mxu0 %v1877
  %v1956 = vpop.f32.mrf.mxu0
  %v1957 = vadd.f32 0.0, %v1956
  %1958 = vdwg.mxu0
  %v1959 = vadd.f32 %v1849, %v1897
  %v1960 = vadd.f32 %v1850, %v1917
  %v1961 = vadd.f32 %v1851, %v1937
  %v1962 = vadd.f32 %v1852, %v1957
  %1963 = vrot.lane.b32.xlu0 %v1105, 111
  %v1964 = vpop.permute.xlu0 %1963
  %1965 = vrot.lane.b32.xlu0 %v1106, 111
  %v1966 = vpop.permute.xlu0 %1965
  %1967 = vrot.lane.b32.xlu0 %v1107, 111
  %v1968 = vpop.permute.xlu0 %1967
  %1969 = vrot.lane.b32.xlu0 %v1108, 111
  %v1970 = vpop.permute.xlu0 %1969
  %v1971 = vsel %vm939, %v1964, %v1966
  %v1972 = vsel %vm939, %v1966, %v1968
  %v1973 = vsel %vm939, %v1968, %v1970
  %v1979 = vsel %vm939, %v1970, %v1964
  %v1980 = vmul.f32 %v1971, %v949
  %v1981 = vmul.f32 %v1972, %v950
  %v1982 = vmul.f32 %v1973, %v951
  %v1983 = vmul.f32 %v1979, %v952
  %s1984 = scalar_lea.vmem %s2, 64
  %v1985 = vld [vmem:[%s1984] sm:$0xff]
  %v1987 = vsel %vm100, %v1985, 0
  %1989 = vmatpush.msra.mxu0 0.0
  %1990 = vmatpush.msra.mxu0 0.0
  %1991 = vmatpush.msra.mxu0 0.0
  %1992 = vmatpush.msra.mxu0 0.0
  %1993 = vmatpush.msra.mxu0 0.0
  %1994 = vmatpush.msra.mxu0 0.0
  %1995 = vmatpush.msra.mxu0 0.0
  %1996 = vmatpush.msra.mxu0 0.0
  %1997 = vmatpush.msra.mxu0 0.0
  %1998 = vmatpush.msra.mxu0 0.0
  %1999 = vmatpush.msra.mxu0 0.0
  %2000 = vmatpush.msra.mxu0 0.0
  %2001 = vmatpush.msra.mxu0 0.0
  %2002 = vmatpush.msra.mxu0 0.0
  %2003 = vmatpush.msra.mxu0 0.0
  %2004 = vmatpush.msra.mxu0 %v1980
  %2005 = vmatmul.f32.gmra.mxu0 %v1987
  %v2006 = vpop.f32.mrf.mxu0
  %v2007 = vadd.f32 0.0, %v2006
  %2008 = vdwg.mxu0
  %2009 = vmatpush.msra.mxu0 0.0
  %2010 = vmatpush.msra.mxu0 0.0
  %2011 = vmatpush.msra.mxu0 0.0
  %2012 = vmatpush.msra.mxu0 0.0
  %2013 = vmatpush.msra.mxu0 0.0
  %2014 = vmatpush.msra.mxu0 0.0
  %2015 = vmatpush.msra.mxu0 0.0
  %2016 = vmatpush.msra.mxu0 0.0
  %2017 = vmatpush.msra.mxu0 0.0
  %2018 = vmatpush.msra.mxu0 0.0
  %2019 = vmatpush.msra.mxu0 0.0
  %2020 = vmatpush.msra.mxu0 0.0
  %2021 = vmatpush.msra.mxu0 0.0
  %2022 = vmatpush.msra.mxu0 0.0
  %2023 = vmatpush.msra.mxu0 0.0
  %2024 = vmatpush.msra.mxu0 %v1981
  %2025 = vmatmul.f32.gmra.mxu0 %v1987
  %v2026 = vpop.f32.mrf.mxu0
  %v2027 = vadd.f32 0.0, %v2026
  %2028 = vdwg.mxu0
  %2029 = vmatpush.msra.mxu0 0.0
  %2030 = vmatpush.msra.mxu0 0.0
  %2031 = vmatpush.msra.mxu0 0.0
  %2032 = vmatpush.msra.mxu0 0.0
  %2033 = vmatpush.msra.mxu0 0.0
  %2034 = vmatpush.msra.mxu0 0.0
  %2035 = vmatpush.msra.mxu0 0.0
  %2036 = vmatpush.msra.mxu0 0.0
  %2037 = vmatpush.msra.mxu0 0.0
  %2038 = vmatpush.msra.mxu0 0.0
  %2039 = vmatpush.msra.mxu0 0.0
  %2040 = vmatpush.msra.mxu0 0.0
  %2041 = vmatpush.msra.mxu0 0.0
  %2042 = vmatpush.msra.mxu0 0.0
  %2043 = vmatpush.msra.mxu0 0.0
  %2044 = vmatpush.msra.mxu0 %v1982
  %2045 = vmatmul.f32.gmra.mxu0 %v1987
  %v2046 = vpop.f32.mrf.mxu0
  %v2047 = vadd.f32 0.0, %v2046
  %2048 = vdwg.mxu0
  %2049 = vmatpush.msra.mxu0 0.0
  %2050 = vmatpush.msra.mxu0 0.0
  %2051 = vmatpush.msra.mxu0 0.0
  %2052 = vmatpush.msra.mxu0 0.0
  %2053 = vmatpush.msra.mxu0 0.0
  %2054 = vmatpush.msra.mxu0 0.0
  %2055 = vmatpush.msra.mxu0 0.0
  %2056 = vmatpush.msra.mxu0 0.0
  %2057 = vmatpush.msra.mxu0 0.0
  %2058 = vmatpush.msra.mxu0 0.0
  %2059 = vmatpush.msra.mxu0 0.0
  %2060 = vmatpush.msra.mxu0 0.0
  %2061 = vmatpush.msra.mxu0 0.0
  %2062 = vmatpush.msra.mxu0 0.0
  %2063 = vmatpush.msra.mxu0 0.0
  %2064 = vmatpush.msra.mxu0 %v1983
  %2065 = vmatmul.f32.gmra.mxu0 %v1987
  %v2066 = vpop.f32.mrf.mxu0
  %v2067 = vadd.f32 0.0, %v2066
  %2068 = vdwg.mxu0
  %v2069 = vadd.f32 %v1959, %v2007
  %v2070 = vadd.f32 %v1960, %v2027
  %v2071 = vadd.f32 %v1961, %v2047
  %v2072 = vadd.f32 %v1962, %v2067
  %v2073 = vadd.f32 %v2069, %v2070
  %v2074 = vadd.f32 %v2073, %v2071
  %v2075 = vadd.f32 %v2074, %v2072
  %2076 = vadd.xlane.f32.xlu0 %v2075
  %v2077 = vpop.xlane.xlu0 %2076
  %v2078 = vmul.f32 %v2077, %v1057
  %v2079 = vsub.f32 %v2069, %v2078
  %v2080 = vsub.f32 %v2070, %v2078
  %v2081 = vsub.f32 %v2071, %v2078
  %v2082 = vsub.f32 %v2072, %v2078
  %v2083 = vmul.f32 %v2079, %v2079
  %v2084 = vmul.f32 %v2080, %v2080
  %v2085 = vmul.f32 %v2081, %v2081
  %v2086 = vmul.f32 %v2082, %v2082
  %v2087 = vadd.f32 %v2083, %v2084
  %v2088 = vadd.f32 %v2087, %v2085
  %v2089 = vadd.f32 %v2088, %v2086
  %2090 = vadd.xlane.f32.xlu0 %v2089
  %v2091 = vpop.xlane.xlu0 %2090
  %v2092 = vmul.f32 %v2091, %v1057
  %v2093 = vld [vmem:[%s5] sm:$0xff]
  %v2094 = vadd.f32 %v2092, 1e-05
  %v2095 = vrsqrt.pop %v2094
  %v2096 = vmul.f32 %v2095, %v2094
  %v2097 = vmul.f32 %v2096, %v2095
  %v2098 = vmul.f32 0.5, %v2097
  %v2099 = vsub.f32 1.5, %v2098
  %v2100 = vmul.f32 %v2095, %v2099
  %vm2101 = vweird.f32 %v2094
  %vm2102 = vweird.f32 %v2095
  %vm2103 = vmor %vm2101, %vm2102
  %v2104 = vsel %vm2103, %v2095, %v2100
  %v2105 = vmul.f32 %v2093, %v2104
  %2107 = vset.pattern.permute.xlu0 0
  %2108 = vperm.xlu0 %2107, %v2105
  %v2109 = vpop.permute.xlu0 %2108
  %v2111 = vmul.f32 %v2079, %v2109
  %v2112 = vmul.f32 %v2080, %v2109
  %v2113 = vmul.f32 %v2081, %v2109
  %v2114 = vmul.f32 %v2082, %v2109
  %v2115 = vld [vmem:[%s6] sm:$0xff]
  %2117 = vset.pattern.permute.xlu0 0
  %2118 = vperm.xlu0 %2117, %v2115
  %v2119 = vpop.permute.xlu0 %2118
  %v2121 = vadd.f32 %v2111, %v2119
  %v2122 = vadd.f32 %v2112, %v2119
  %v2123 = vadd.f32 %v2113, %v2119
  %v2124 = vadd.f32 %v2114, %v2119
  %v2125 = vmax.f32 %v2121, 0.0
  %v2126 = vmax.f32 %v2122, 0.0
  %v2127 = vmax.f32 %v2123, 0.0
  %v2128 = vmax.f32 %v2124, 0.0
  %2129 = vst [vmem:[%s8] sm:$0xff] %v2125
  %2130 = vst [vmem:[%s8 + $0x8] sm:$0xff] %v2126
  %2131 = vst [vmem:[%s8 + $0x10] sm:$0xff] %v2127
  %2132 = vst [vmem:[%s8 + $0x18] sm:$0xff] %v2128
  // Predicated region
  $region34: #{encoder_block.1} parent=0 // pred_check
    _
  $region35: #{encoder_block.1} parent=0 // pred_check_branch
    %2134 = sbr.rel (0) target = $region37
  $region36: #{encoder_block.1} parent=0 // pred_region
    _
  $region37: #{encoder_block.1} parent=0 // pred_fallthru
    _
  // Predicated region
  $region38: #{encoder_block.1} parent=0 // pred_check
    _
  $region39: #{encoder_block.1} parent=0 // pred_check_branch
    %2136 = sbr.rel (0) target = $region41
  $region40: #{encoder_block.1} parent=0 // pred_region
    _
  $region41: #{encoder_block.1} parent=0 // pred_fallthru
    _

</llo_original>
